<compile_context>
chip_gen: v7x
topology: tpu7x:2x2x1
jax: 0.10.0
libtpu: 0.0.40
codegen_flags: <defaults>
</compile_context>

<pallas_src>
import jax
import jax.numpy as jnp
from jax.experimental import pallas as pl
from jax.experimental.pallas import tpu as pltpu

K = 3          # kernel_size
STRIDE = 2     # ConvTranspose1d stride
EPS = 1e-5     # BatchNorm eps
_SUBLANE = 8   # f32 sublane multiple


def _ceil_to(x, m):
    return ((x + m - 1) // m) * m


def up1d_kernel(x1s_ref, x2s_ref, wup_ref, yb_ref, w1x_ref, w1y_ref, t1_ref,
                w2_ref, t2_ref, mz_ref, out_ref):
    f32 = jnp.float32
    bf16 = jnp.bfloat16
    NB, cout, L2 = out_ref.shape
    P = L2 + 2
    NBP = mz_ref.shape[1]          # == NB * P

    x1s = x1s_ref[0]               # (C1P, NBP + 4) bf16, zero-inserted x1 per period
    x2s = x2s_ref[0]               # (C2P, NBP + 2) bf16, x2 with halo cols per period

    # ---- ConvTranspose1d: K accumulated dots over lane-shifted views ----
    y = jnp.dot(wup_ref[0], x1s[:, 0:NBP + 2], preferred_element_type=f32)
    y = y + jnp.dot(wup_ref[1], x1s[:, 1:NBP + 3], preferred_element_type=f32)
    y = y + jnp.dot(wup_ref[2], x1s[:, 2:NBP + 4], preferred_element_type=f32)
    y = y + yb_ref[...]            # up-conv bias only at valid (non-F.pad) columns
    yb16 = y.astype(bf16)          # (C2P, NBP + 2)

    # ---- conv1 (+ folded BN scale) + shift + ReLU ----
    z1 = jnp.dot(w1x_ref[0], x2s[:, 0:NBP], preferred_element_type=f32)
    z1 = z1 + jnp.dot(w1x_ref[1], x2s[:, 1:NBP + 1], preferred_element_type=f32)
    z1 = z1 + jnp.dot(w1x_ref[2], x2s[:, 2:NBP + 2], preferred_element_type=f32)
    z1 = z1 + jnp.dot(w1y_ref[0], yb16[:, 0:NBP], preferred_element_type=f32)
    z1 = z1 + jnp.dot(w1y_ref[1], yb16[:, 1:NBP + 1], preferred_element_type=f32)
    z1 = z1 + jnp.dot(w1y_ref[2], yb16[:, 2:NBP + 2], preferred_element_type=f32)
    z1 = jnp.maximum(z1 + t1_ref[...], 0.0) * mz_ref[...]   # zero halo/junk columns
    z1b = z1.astype(bf16)          # (MP, NBP)

    # ---- conv2 (+ folded BN scale) + shift + ReLU ----
    z2 = jnp.dot(w2_ref[0], z1b[:, 0:NBP - 2], preferred_element_type=f32)
    z2 = z2 + jnp.dot(w2_ref[1], z1b[:, 1:NBP - 1], preferred_element_type=f32)
    z2 = z2 + jnp.dot(w2_ref[2], z1b[:, 2:NBP], preferred_element_type=f32)
    z2 = jnp.maximum(z2 + t2_ref[...], 0.0)                  # (OP, NBP - 2)

    # ---- per-sample stores: no post-kernel transpose needed in the wrapper ----
    for b in range(NB):
        out_ref[b] = z2[:cout, b * P:b * P + L2].astype(out_ref.dtype)


def _step_vmem_bytes(nb, P, L2, C1P, C2P, MP, OP):
    w = nb * P
    live = w * (2 * C1P + 2 * C2P + 6 * C2P + 6 * MP + 4 * OP)          # slabs/temps
    bufs = 2 * w * (2 * C1P + 2 * C2P + 4 * C2P) + 2 * nb * OP * L2 * 4  # pipelined blocks
    wts = 4 * (K * C2P * C1P + 2 * K * MP * C2P + K * OP * MP) + 8 * (MP + OP)
    return live + bufs + wts


def _choose_nb(N, P, L2, C1P, C2P, MP, OP, nb_max, lane_target, budget):
    cap = max(1, min(N, nb_max, max(1, lane_target // P)))
    if N >= 2:
        cap = min(cap, -(-N // 2))      # keep >= 2 grid steps (2 TensorCores on v7x)
    nb = cap
    while nb > 1 and _step_vmem_bytes(nb, P, L2, C1P, C2P, MP, OP) > budget:
        nb -= 1
    for d in range(nb, 0, -1):          # prefer a divisor of N (no batch padding)
        if N % d == 0:
            if 2 * d >= nb:
                nb = d
            break
    return nb


def up1d_forward(x1, x2, params, nb_max=8, lane_target=1024):
    """x1: (N, C1, L1), x2: (N, C1//2, L2)  ->  (N, cout, L2)"""
    f32 = jnp.float32
    bf16 = jnp.bfloat16
    N, C1, L1 = x1.shape
    N2, C2, L2 = x2.shape
    assert N2 == N and C2 == C1 // 2
    mid = params["w1"].shape[0]
    cout = params["w2"].shape[0]

    Lu = (L1 - 1) * STRIDE + K           # ConvTranspose1d output length
    diff = L2 - Lu
    assert diff >= 0, "x2 must be at least as long as the upsampled x1"
    pad_l = diff // 2
    Lz = (L1 - 1) * STRIDE + 1           # zero-inserted length

    C1P = _ceil_to(C1, _SUBLANE)
    C2P = _ceil_to(C2, _SUBLANE)
    MP = _ceil_to(mid, _SUBLANE)
    OP = _ceil_to(cout, _SUBLANE)
    P = L2 + 2                           # per-sample period: halo | L2 data | halo

    NB = _choose_nb(N, P, L2, C1P, C2P, MP, OP, nb_max, lane_target,
                    budget=40 * 2**20)
    NBLK = -(-N // NB)
    N_pad = NBLK * NB
    NBP = NB * P

    # ---- x1 slab: zero-inserted x1 placed inside each sample period (no scatter) ----
    x1f = x1.astype(f32)
    x1z = jnp.stack([x1f, jnp.zeros_like(x1f)], axis=-1).reshape(N, C1, 2 * L1)[:, :, :Lz]
    left = pad_l + (K - 1)
    x1per = jnp.pad(x1z, ((0, N_pad - N), (0, C1P - C1), (left, P - left - Lz)))
    X1S = x1per.reshape(NBLK, NB, C1P, P).transpose(0, 2, 1, 3).reshape(NBLK, C1P, NBP)
    X1S = jnp.pad(X1S, ((0, 0), (0, 0), (2, 2))).astype(bf16)         # (NBLK, C1P, NBP+4)

    # ---- x2 slab: one zero halo column on each side of every sample ----
    x2per = jnp.pad(x2.astype(f32), ((0, N_pad - N), (0, C2P - C2), (1, 1)))
    X2S = x2per.reshape(NBLK, NB, C2P, P).transpose(0, 2, 1, 3).reshape(NBLK, C2P, NBP)
    X2S = jnp.pad(X2S, ((0, 0), (0, 0), (1, 1))).astype(bf16)         # (NBLK, C2P, NBP+2)

    # ---- up-conv bias, only at valid (non-F.pad) output positions ----
    jj = jnp.arange(NBP + 2)
    rr = (jj - 1) % P
    ymask = ((rr >= pad_l + 1) & (rr <= pad_l + Lu)).astype(f32)
    bup_p = jnp.pad(params["bup"].astype(f32), (0, C2P - C2))
    YB = bup_p[:, None] * ymask[None, :]                               # (C2P, NBP+2)

    # ---- mask zeroing conv1-output halo/junk columns before conv2 ----
    r2 = jnp.arange(NBP) % P
    MZ = ((r2 >= 1) & (r2 <= L2)).astype(f32).reshape(1, NBP)

    # ---- weights: K taps as leading dim, BN scale folded, bf16, channel-padded ----
    wup = params["wup"].astype(f32)                                    # (C1, C2, K)
    WUP = jnp.zeros((K, C2P, C1P), f32)
    for t in range(K):
        WUP = WUP.at[t, :C2, :C1].set(jnp.transpose(wup[:, :, K - 1 - t]))
    WUP = WUP.astype(bf16)

    s1 = params["g1"].astype(f32) / jnp.sqrt(1.0 + EPS)                # eval BN scale
    w1s = params["w1"].astype(f32) * s1[:, None, None]                 # (mid, C1, K)
    W1X = jnp.zeros((K, MP, C2P), f32)
    W1Y = jnp.zeros((K, MP, C2P), f32)
    for t in range(K):
        W1X = W1X.at[t, :mid, :C2].set(w1s[:, :C2, t])                 # x2 half of concat
        W1Y = W1Y.at[t, :mid, :C2].set(w1s[:, C2:, t])                 # upsampled half
    W1X = W1X.astype(bf16)
    W1Y = W1Y.astype(bf16)
    T1 = jnp.zeros((MP, 1), f32).at[:mid, 0].set(params["b1"].astype(f32))

    s2 = params["g2"].astype(f32) / jnp.sqrt(1.0 + EPS)
    w2s = params["w2"].astype(f32) * s2[:, None, None]                 # (cout, mid, K)
    W2 = jnp.zeros((K, OP, MP), f32)
    for t in range(K):
        W2 = W2.at[t, :cout, :mid].set(w2s[:, :, t])
    W2 = W2.astype(bf16)
    T2 = jnp.zeros((OP, 1), f32).at[:cout, 0].set(params["b2"].astype(f32))

    vmem_limit = int(min(56 * 2**20,
                         max(32 * 2**20,
                             2 * _step_vmem_bytes(NB, P, L2, C1P, C2P, MP, OP))))

    grid_spec = pltpu.PrefetchScalarGridSpec(
        num_scalar_prefetch=0,
        grid=(NBLK,),
        in_specs=[
            pl.BlockSpec((1, C1P, NBP + 4), lambda n: (n, 0, 0)),   # X1S
            pl.BlockSpec((1, C2P, NBP + 2), lambda n: (n, 0, 0)),   # X2S
            pl.BlockSpec((K, C2P, C1P), lambda n: (0, 0, 0)),       # WUP
            pl.BlockSpec((C2P, NBP + 2), lambda n: (0, 0)),         # YB
            pl.BlockSpec((K, MP, C2P), lambda n: (0, 0, 0)),        # W1X
            pl.BlockSpec((K, MP, C2P), lambda n: (0, 0, 0)),        # W1Y
            pl.BlockSpec((MP, 1), lambda n: (0, 0)),                # T1
            pl.BlockSpec((K, OP, MP), lambda n: (0, 0, 0)),         # W2
            pl.BlockSpec((OP, 1), lambda n: (0, 0)),                # T2
            pl.BlockSpec((1, NBP), lambda n: (0, 0)),               # MZ
        ],
        out_specs=pl.BlockSpec((NB, cout, L2), lambda n: (n, 0, 0)),
    )

    out = pl.pallas_call(
        up1d_kernel,
        out_shape=jax.ShapeDtypeStruct((N_pad, cout, L2), f32),
        grid_spec=grid_spec,
        compiler_params=pltpu.CompilerParams(
            dimension_semantics=("parallel",),
            vmem_limit_bytes=vmem_limit,
        ),
    )(X1S, X2S, WUP, YB, W1X, W1Y, T1, W2, T2, MZ)

    return out if N_pad == N else out[:N]


# ---------------- pure-JAX reference (for correctness check) ----------------
def _conv1d_ref(x, w, padding):
    return jax.lax.conv_general_dilated(
        x, w, window_strides=(1,), padding=[(padding, padding)],
        dimension_numbers=("NCH", "OIH", "NCH"))


def _conv_transpose1d_ref(x, w, b, stride):
    # w: (C_in, C_out, K) pytorch layout
    wf = jnp.transpose(jnp.flip(w, axis=2), (1, 0, 2))  # (C_out, C_in, K)
    y = jax.lax.conv_general_dilated(
        x, wf, window_strides=(1,), padding=[(w.shape[2] - 1, w.shape[2] - 1)],
        lhs_dilation=(stride,), dimension_numbers=("NCH", "OIH", "NCH"))
    return y + b[None, :, None]


def _bn_eval(z, g, b):
    scale = g / jnp.sqrt(1.0 + EPS)
    return z * scale[None, :, None] + b[None, :, None]


def up1d_reference(x1, x2, p):
    y = _conv_transpose1d_ref(x1, p["wup"], p["bup"], STRIDE)
    diff = x2.shape[2] - y.shape[2]
    y = jnp.pad(y, ((0, 0), (0, 0), (diff // 2, diff - diff // 2)))
    x = jnp.concatenate([x2, y], axis=1)
    z = jax.nn.relu(_bn_eval(_conv1d_ref(x, p["w1"], 1), p["g1"], p["b1"]))
    z = jax.nn.relu(_bn_eval(_conv1d_ref(z, p["w2"], 1), p["g2"], p["b2"]))
    return z


if __name__ == "__main__":
    N, C1, Cout = 2, 8, 4       # in_channels=8, out_channels=4 (mid=out)
    L1, L2 = 8, 20              # upsampled len = (8-1)*2+3 = 17, diff = 3

    key = jax.random.PRNGKey(0)
    keys = jax.random.split(key, 10)
    x1 = jax.random.normal(keys[0], (N, C1, L1), jnp.float32)
    x2 = jax.random.normal(keys[1], (N, C1 // 2, L2), jnp.float32)

    params = dict(
        wup=0.1 * jax.random.normal(keys[2], (C1, C1 // 2, K), jnp.float32),
        bup=0.1 * jax.random.normal(keys[3], (C1 // 2,), jnp.float32),
        w1=0.1 * jax.random.normal(keys[4], (Cout, C1, K), jnp.float32),
        g1=1.0 + 0.1 * jax.random.normal(keys[5], (Cout,), jnp.float32),
        b1=0.1 * jax.random.normal(keys[6], (Cout,), jnp.float32),
        w2=0.1 * jax.random.normal(keys[7], (Cout, Cout, K), jnp.float32),
        g2=1.0 + 0.1 * jax.random.normal(keys[8], (Cout,), jnp.float32),
        b2=0.1 * jax.random.normal(keys[9], (Cout,), jnp.float32),
    )

    out = up1d_forward(x1, x2, params)
    jax.block_until_ready(out)

    ref = up1d_reference(x1, x2, params)
    assert out.shape == (N, Cout, L2)
    # bf16 MXU operands (f32 accumulation) -> relaxed tolerance vs the f32 reference.
    assert jnp.allclose(out, ref, atol=2e-2, rtol=2e-2), "mismatch vs reference"
    print("KERNEL_OK")
</pallas_src>

<mosaic_0001>
module attributes {stable_mosaic.version = 11 : i64} {
  func.func @up1d_kernel(%arg0: i32, %arg1: memref<1x8x26xbf16, #tpu.memory_space<vmem>>, %arg2: memref<1x8x24xbf16, #tpu.memory_space<vmem>>, %arg3: memref<3x8x8xbf16, #tpu.memory_space<vmem>>, %arg4: memref<8x24xf32, #tpu.memory_space<vmem>>, %arg5: memref<3x8x8xbf16, #tpu.memory_space<vmem>>, %arg6: memref<3x8x8xbf16, #tpu.memory_space<vmem>>, %arg7: memref<8x1xf32, #tpu.memory_space<vmem>>, %arg8: memref<3x8x8xbf16, #tpu.memory_space<vmem>>, %arg9: memref<8x1xf32, #tpu.memory_space<vmem>>, %arg10: memref<1x22xf32, #tpu.memory_space<vmem>>, %arg11: memref<1x4x20xf32, #tpu.memory_space<vmem>>) attributes {dimension_semantics = [#tpu.dimension_semantics<parallel>], iteration_bounds = array<i64: 2>, scalar_prefetch = 0 : i64, scratch_operands = 0 : i64, tpu.core_type = #tpu.core_type<tc>, window_params = [{transform_indices = @transform_0, window_bounds = array<i64: 1, 8, 26>}, {transform_indices = @transform_1, window_bounds = array<i64: 1, 8, 24>}, {pipeline_mode = #tpu.pipeline_mode<synchronous>, transform_indices = @transform_2, window_bounds = array<i64: 3, 8, 8>}, {pipeline_mode = #tpu.pipeline_mode<synchronous>, transform_indices = @transform_3, window_bounds = array<i64: 8, 24>}, {pipeline_mode = #tpu.pipeline_mode<synchronous>, transform_indices = @transform_4, window_bounds = array<i64: 3, 8, 8>}, {pipeline_mode = #tpu.pipeline_mode<synchronous>, transform_indices = @transform_5, window_bounds = array<i64: 3, 8, 8>}, {pipeline_mode = #tpu.pipeline_mode<synchronous>, transform_indices = @transform_6, window_bounds = array<i64: 8, 1>}, {pipeline_mode = #tpu.pipeline_mode<synchronous>, transform_indices = @transform_7, window_bounds = array<i64: 3, 8, 8>}, {pipeline_mode = #tpu.pipeline_mode<synchronous>, transform_indices = @transform_8, window_bounds = array<i64: 8, 1>}, {pipeline_mode = #tpu.pipeline_mode<synchronous>, transform_indices = @transform_9, window_bounds = array<i64: 1, 22>}, {transform_indices = @transform_10, window_bounds = array<i64: 1, 4, 20>}]} {
    %c0 = arith.constant 0 : index
    %c0_0 = arith.constant 0 : index
    %c0_1 = arith.constant 0 : index
    %0 = vector.load %arg1[%c0, %c0_0, %c0_1] : memref<1x8x26xbf16, #tpu.memory_space<vmem>>, vector<1x8x26xbf16>
    %1 = vector.shape_cast %0 : vector<1x8x26xbf16> to vector<8x26xbf16>
    %c0_2 = arith.constant 0 : index
    %c0_3 = arith.constant 0 : index
    %c0_4 = arith.constant 0 : index
    %2 = vector.load %arg2[%c0_2, %c0_3, %c0_4] : memref<1x8x24xbf16, #tpu.memory_space<vmem>>, vector<1x8x24xbf16>
    %3 = vector.shape_cast %2 : vector<1x8x24xbf16> to vector<8x24xbf16>
    %c0_5 = arith.constant 0 : index
    %c0_6 = arith.constant 0 : index
    %c0_7 = arith.constant 0 : index
    %4 = vector.load %arg3[%c0_5, %c0_6, %c0_7] : memref<3x8x8xbf16, #tpu.memory_space<vmem>>, vector<1x8x8xbf16>
    %5 = vector.shape_cast %4 : vector<1x8x8xbf16> to vector<8x8xbf16>
    %6 = vector.extract_strided_slice %1 {offsets = [0, 0], sizes = [8, 24], strides = [1, 1]} : vector<8x26xbf16> to vector<8x24xbf16>
    %cst = arith.constant dense<0.000000e+00> : vector<8x24xf32>
    %7 = tpu.matmul %5, %6, %cst {dimension_numbers = #tpu.dot_dimension_numbers<[1], [0], [0], [1], [0, 0, 1, 1], [], []>} : vector<8x8xbf16>, vector<8x24xbf16>, vector<8x24xf32> -> vector<8x24xf32>
    %c1 = arith.constant 1 : index
    %c0_8 = arith.constant 0 : index
    %c0_9 = arith.constant 0 : index
    %8 = vector.load %arg3[%c1, %c0_8, %c0_9] : memref<3x8x8xbf16, #tpu.memory_space<vmem>>, vector<1x8x8xbf16>
    %9 = vector.shape_cast %8 : vector<1x8x8xbf16> to vector<8x8xbf16>
    %10 = vector.extract_strided_slice %1 {offsets = [0, 1], sizes = [8, 24], strides = [1, 1]} : vector<8x26xbf16> to vector<8x24xbf16>
    %cst_10 = arith.constant dense<0.000000e+00> : vector<8x24xf32>
    %11 = tpu.matmul %9, %10, %cst_10 {dimension_numbers = #tpu.dot_dimension_numbers<[1], [0], [0], [1], [0, 0, 1, 1], [], []>} : vector<8x8xbf16>, vector<8x24xbf16>, vector<8x24xf32> -> vector<8x24xf32>
    %12 = arith.addf %7, %11 : vector<8x24xf32>
    %c2 = arith.constant 2 : index
    %c0_11 = arith.constant 0 : index
    %c0_12 = arith.constant 0 : index
    %13 = vector.load %arg3[%c2, %c0_11, %c0_12] : memref<3x8x8xbf16, #tpu.memory_space<vmem>>, vector<1x8x8xbf16>
    %14 = vector.shape_cast %13 : vector<1x8x8xbf16> to vector<8x8xbf16>
    %15 = vector.extract_strided_slice %1 {offsets = [0, 2], sizes = [8, 24], strides = [1, 1]} : vector<8x26xbf16> to vector<8x24xbf16>
    %cst_13 = arith.constant dense<0.000000e+00> : vector<8x24xf32>
    %16 = tpu.matmul %14, %15, %cst_13 {dimension_numbers = #tpu.dot_dimension_numbers<[1], [0], [0], [1], [0, 0, 1, 1], [], []>} : vector<8x8xbf16>, vector<8x24xbf16>, vector<8x24xf32> -> vector<8x24xf32>
    %17 = arith.addf %12, %16 : vector<8x24xf32>
    %c0_14 = arith.constant 0 : index
    %c0_15 = arith.constant 0 : index
    %18 = vector.load %arg4[%c0_14, %c0_15] : memref<8x24xf32, #tpu.memory_space<vmem>>, vector<8x24xf32>
    %19 = arith.addf %17, %18 : vector<8x24xf32>
    %20 = arith.truncf %19 : vector<8x24xf32> to vector<8x24xbf16>
    %c0_16 = arith.constant 0 : index
    %c0_17 = arith.constant 0 : index
    %c0_18 = arith.constant 0 : index
    %21 = vector.load %arg5[%c0_16, %c0_17, %c0_18] : memref<3x8x8xbf16, #tpu.memory_space<vmem>>, vector<1x8x8xbf16>
    %22 = vector.shape_cast %21 : vector<1x8x8xbf16> to vector<8x8xbf16>
    %23 = vector.extract_strided_slice %3 {offsets = [0, 0], sizes = [8, 22], strides = [1, 1]} : vector<8x24xbf16> to vector<8x22xbf16>
    %cst_19 = arith.constant dense<0.000000e+00> : vector<8x22xf32>
    %24 = tpu.matmul %22, %23, %cst_19 {dimension_numbers = #tpu.dot_dimension_numbers<[1], [0], [0], [1], [0, 0, 1, 1], [], []>} : vector<8x8xbf16>, vector<8x22xbf16>, vector<8x22xf32> -> vector<8x22xf32>
    %c1_20 = arith.constant 1 : index
    %c0_21 = arith.constant 0 : index
    %c0_22 = arith.constant 0 : index
    %25 = vector.load %arg5[%c1_20, %c0_21, %c0_22] : memref<3x8x8xbf16, #tpu.memory_space<vmem>>, vector<1x8x8xbf16>
    %26 = vector.shape_cast %25 : vector<1x8x8xbf16> to vector<8x8xbf16>
    %27 = vector.extract_strided_slice %3 {offsets = [0, 1], sizes = [8, 22], strides = [1, 1]} : vector<8x24xbf16> to vector<8x22xbf16>
    %cst_23 = arith.constant dense<0.000000e+00> : vector<8x22xf32>
    %28 = tpu.matmul %26, %27, %cst_23 {dimension_numbers = #tpu.dot_dimension_numbers<[1], [0], [0], [1], [0, 0, 1, 1], [], []>} : vector<8x8xbf16>, vector<8x22xbf16>, vector<8x22xf32> -> vector<8x22xf32>
    %29 = arith.addf %24, %28 : vector<8x22xf32>
    %c2_24 = arith.constant 2 : index
    %c0_25 = arith.constant 0 : index
    %c0_26 = arith.constant 0 : index
    %30 = vector.load %arg5[%c2_24, %c0_25, %c0_26] : memref<3x8x8xbf16, #tpu.memory_space<vmem>>, vector<1x8x8xbf16>
    %31 = vector.shape_cast %30 : vector<1x8x8xbf16> to vector<8x8xbf16>
    %32 = vector.extract_strided_slice %3 {offsets = [0, 2], sizes = [8, 22], strides = [1, 1]} : vector<8x24xbf16> to vector<8x22xbf16>
    %cst_27 = arith.constant dense<0.000000e+00> : vector<8x22xf32>
    %33 = tpu.matmul %31, %32, %cst_27 {dimension_numbers = #tpu.dot_dimension_numbers<[1], [0], [0], [1], [0, 0, 1, 1], [], []>} : vector<8x8xbf16>, vector<8x22xbf16>, vector<8x22xf32> -> vector<8x22xf32>
    %34 = arith.addf %29, %33 : vector<8x22xf32>
    %c0_28 = arith.constant 0 : index
    %c0_29 = arith.constant 0 : index
    %c0_30 = arith.constant 0 : index
    %35 = vector.load %arg6[%c0_28, %c0_29, %c0_30] : memref<3x8x8xbf16, #tpu.memory_space<vmem>>, vector<1x8x8xbf16>
    %36 = vector.shape_cast %35 : vector<1x8x8xbf16> to vector<8x8xbf16>
    %37 = vector.extract_strided_slice %20 {offsets = [0, 0], sizes = [8, 22], strides = [1, 1]} : vector<8x24xbf16> to vector<8x22xbf16>
    %cst_31 = arith.constant dense<0.000000e+00> : vector<8x22xf32>
    %38 = tpu.matmul %36, %37, %cst_31 {dimension_numbers = #tpu.dot_dimension_numbers<[1], [0], [0], [1], [0, 0, 1, 1], [], []>} : vector<8x8xbf16>, vector<8x22xbf16>, vector<8x22xf32> -> vector<8x22xf32>
    %39 = arith.addf %34, %38 : vector<8x22xf32>
    %c1_32 = arith.constant 1 : index
    %c0_33 = arith.constant 0 : index
    %c0_34 = arith.constant 0 : index
    %40 = vector.load %arg6[%c1_32, %c0_33, %c0_34] : memref<3x8x8xbf16, #tpu.memory_space<vmem>>, vector<1x8x8xbf16>
    %41 = vector.shape_cast %40 : vector<1x8x8xbf16> to vector<8x8xbf16>
    %42 = vector.extract_strided_slice %20 {offsets = [0, 1], sizes = [8, 22], strides = [1, 1]} : vector<8x24xbf16> to vector<8x22xbf16>
    %cst_35 = arith.constant dense<0.000000e+00> : vector<8x22xf32>
    %43 = tpu.matmul %41, %42, %cst_35 {dimension_numbers = #tpu.dot_dimension_numbers<[1], [0], [0], [1], [0, 0, 1, 1], [], []>} : vector<8x8xbf16>, vector<8x22xbf16>, vector<8x22xf32> -> vector<8x22xf32>
    %44 = arith.addf %39, %43 : vector<8x22xf32>
    %c2_36 = arith.constant 2 : index
    %c0_37 = arith.constant 0 : index
    %c0_38 = arith.constant 0 : index
    %45 = vector.load %arg6[%c2_36, %c0_37, %c0_38] : memref<3x8x8xbf16, #tpu.memory_space<vmem>>, vector<1x8x8xbf16>
    %46 = vector.shape_cast %45 : vector<1x8x8xbf16> to vector<8x8xbf16>
    %47 = vector.extract_strided_slice %20 {offsets = [0, 2], sizes = [8, 22], strides = [1, 1]} : vector<8x24xbf16> to vector<8x22xbf16>
    %cst_39 = arith.constant dense<0.000000e+00> : vector<8x22xf32>
    %48 = tpu.matmul %46, %47, %cst_39 {dimension_numbers = #tpu.dot_dimension_numbers<[1], [0], [0], [1], [0, 0, 1, 1], [], []>} : vector<8x8xbf16>, vector<8x22xbf16>, vector<8x22xf32> -> vector<8x22xf32>
    %49 = arith.addf %44, %48 : vector<8x22xf32>
    %c0_40 = arith.constant 0 : index
    %c0_41 = arith.constant 0 : index
    %50 = vector.load %arg7[%c0_40, %c0_41] : memref<8x1xf32, #tpu.memory_space<vmem>>, vector<8x1xf32>
    %51 = vector.broadcast %50 : vector<8x1xf32> to vector<8x22xf32>
    %52 = arith.addf %49, %51 : vector<8x22xf32>
    %cst_42 = arith.constant 0.000000e+00 : f32
    %53 = vector.broadcast %cst_42 : f32 to vector<8x22xf32>
    %54 = arith.maximumf %52, %53 : vector<8x22xf32>
    %c0_43 = arith.constant 0 : index
    %c0_44 = arith.constant 0 : index
    %55 = vector.load %arg10[%c0_43, %c0_44] : memref<1x22xf32, #tpu.memory_space<vmem>>, vector<1x22xf32>
    %56 = vector.broadcast %55 : vector<1x22xf32> to vector<8x22xf32>
    %57 = arith.mulf %54, %56 : vector<8x22xf32>
    %58 = arith.truncf %57 : vector<8x22xf32> to vector<8x22xbf16>
    %c0_45 = arith.constant 0 : index
    %c0_46 = arith.constant 0 : index
    %c0_47 = arith.constant 0 : index
    %59 = vector.load %arg8[%c0_45, %c0_46, %c0_47] : memref<3x8x8xbf16, #tpu.memory_space<vmem>>, vector<1x8x8xbf16>
    %60 = vector.shape_cast %59 : vector<1x8x8xbf16> to vector<8x8xbf16>
    %61 = vector.extract_strided_slice %58 {offsets = [0, 0], sizes = [8, 20], strides = [1, 1]} : vector<8x22xbf16> to vector<8x20xbf16>
    %cst_48 = arith.constant dense<0.000000e+00> : vector<8x20xf32>
    %62 = tpu.matmul %60, %61, %cst_48 {dimension_numbers = #tpu.dot_dimension_numbers<[1], [0], [0], [1], [0, 0, 1, 1], [], []>} : vector<8x8xbf16>, vector<8x20xbf16>, vector<8x20xf32> -> vector<8x20xf32>
    %c1_49 = arith.constant 1 : index
    %c0_50 = arith.constant 0 : index
    %c0_51 = arith.constant 0 : index
    %63 = vector.load %arg8[%c1_49, %c0_50, %c0_51] : memref<3x8x8xbf16, #tpu.memory_space<vmem>>, vector<1x8x8xbf16>
    %64 = vector.shape_cast %63 : vector<1x8x8xbf16> to vector<8x8xbf16>
    %65 = vector.extract_strided_slice %58 {offsets = [0, 1], sizes = [8, 20], strides = [1, 1]} : vector<8x22xbf16> to vector<8x20xbf16>
    %cst_52 = arith.constant dense<0.000000e+00> : vector<8x20xf32>
    %66 = tpu.matmul %64, %65, %cst_52 {dimension_numbers = #tpu.dot_dimension_numbers<[1], [0], [0], [1], [0, 0, 1, 1], [], []>} : vector<8x8xbf16>, vector<8x20xbf16>, vector<8x20xf32> -> vector<8x20xf32>
    %67 = arith.addf %62, %66 : vector<8x20xf32>
    %c2_53 = arith.constant 2 : index
    %c0_54 = arith.constant 0 : index
    %c0_55 = arith.constant 0 : index
    %68 = vector.load %arg8[%c2_53, %c0_54, %c0_55] : memref<3x8x8xbf16, #tpu.memory_space<vmem>>, vector<1x8x8xbf16>
    %69 = vector.shape_cast %68 : vector<1x8x8xbf16> to vector<8x8xbf16>
    %70 = vector.extract_strided_slice %58 {offsets = [0, 2], sizes = [8, 20], strides = [1, 1]} : vector<8x22xbf16> to vector<8x20xbf16>
    %cst_56 = arith.constant dense<0.000000e+00> : vector<8x20xf32>
    %71 = tpu.matmul %69, %70, %cst_56 {dimension_numbers = #tpu.dot_dimension_numbers<[1], [0], [0], [1], [0, 0, 1, 1], [], []>} : vector<8x8xbf16>, vector<8x20xbf16>, vector<8x20xf32> -> vector<8x20xf32>
    %72 = arith.addf %67, %71 : vector<8x20xf32>
    %c0_57 = arith.constant 0 : index
    %c0_58 = arith.constant 0 : index
    %73 = vector.load %arg9[%c0_57, %c0_58] : memref<8x1xf32, #tpu.memory_space<vmem>>, vector<8x1xf32>
    %74 = vector.broadcast %73 : vector<8x1xf32> to vector<8x20xf32>
    %75 = arith.addf %72, %74 : vector<8x20xf32>
    %cst_59 = arith.constant 0.000000e+00 : f32
    %76 = vector.broadcast %cst_59 : f32 to vector<8x20xf32>
    %77 = arith.maximumf %75, %76 : vector<8x20xf32>
    %78 = vector.extract_strided_slice %77 {offsets = [0, 0], sizes = [4, 20], strides = [1, 1]} : vector<8x20xf32> to vector<4x20xf32>
    %c0_60 = arith.constant 0 : index
    %c0_61 = arith.constant 0 : index
    %c0_62 = arith.constant 0 : index
    %79 = vector.load %arg11[%c0_60, %c0_61, %c0_62] : memref<1x4x20xf32, #tpu.memory_space<vmem>>, vector<1x4x20xf32>
    %80 = vector.shape_cast %79 : vector<1x4x20xf32> to vector<4x20xf32>
    %81 = vector.shape_cast %78 : vector<4x20xf32> to vector<1x4x20xf32>
    tpu.vector_store %arg11[%c0_60, %c0_61, %c0_62], %81 {strides = array<i32>} : memref<1x4x20xf32, #tpu.memory_space<vmem>>, vector<1x4x20xf32>,
    return
  }
  func.func @transform_0(%arg0: i32) -> (i32, i32, i32) {
    %c0_i32 = arith.constant 0 : i32
    %c0_i32_0 = arith.constant 0 : i32
    %c0_i32_1 = arith.constant 0 : i32
    return %arg0, %c0_i32, %c0_i32_0 : i32, i32, i32
  }
  func.func @transform_1(%arg0: i32) -> (i32, i32, i32) {
    %c0_i32 = arith.constant 0 : i32
    %c0_i32_0 = arith.constant 0 : i32
    %c0_i32_1 = arith.constant 0 : i32
    return %arg0, %c0_i32, %c0_i32_0 : i32, i32, i32
  }
  func.func @transform_2(%arg0: i32) -> (i32, i32, i32) {
    %c0_i32 = arith.constant 0 : i32
    %c0_i32_0 = arith.constant 0 : i32
    %c0_i32_1 = arith.constant 0 : i32
    %c0_i32_2 = arith.constant 0 : i32
    return %c0_i32, %c0_i32_0, %c0_i32_1 : i32, i32, i32
  }
  func.func @transform_3(%arg0: i32) -> (i32, i32) {
    %c0_i32 = arith.constant 0 : i32
    %c0_i32_0 = arith.constant 0 : i32
    %c0_i32_1 = arith.constant 0 : i32
    return %c0_i32, %c0_i32_0 : i32, i32
  }
  func.func @transform_4(%arg0: i32) -> (i32, i32, i32) {
    %c0_i32 = arith.constant 0 : i32
    %c0_i32_0 = arith.constant 0 : i32
    %c0_i32_1 = arith.constant 0 : i32
    %c0_i32_2 = arith.constant 0 : i32
    return %c0_i32, %c0_i32_0, %c0_i32_1 : i32, i32, i32
  }
  func.func @transform_5(%arg0: i32) -> (i32, i32, i32) {
    %c0_i32 = arith.constant 0 : i32
    %c0_i32_0 = arith.constant 0 : i32
    %c0_i32_1 = arith.constant 0 : i32
    %c0_i32_2 = arith.constant 0 : i32
    return %c0_i32, %c0_i32_0, %c0_i32_1 : i32, i32, i32
  }
  func.func @transform_6(%arg0: i32) -> (i32, i32) {
    %c0_i32 = arith.constant 0 : i32
    %c0_i32_0 = arith.constant 0 : i32
    %c0_i32_1 = arith.constant 0 : i32
    return %c0_i32, %c0_i32_0 : i32, i32
  }
  func.func @transform_7(%arg0: i32) -> (i32, i32, i32) {
    %c0_i32 = arith.constant 0 : i32
    %c0_i32_0 = arith.constant 0 : i32
    %c0_i32_1 = arith.constant 0 : i32
    %c0_i32_2 = arith.constant 0 : i32
    return %c0_i32, %c0_i32_0, %c0_i32_1 : i32, i32, i32
  }
  func.func @transform_8(%arg0: i32) -> (i32, i32) {
    %c0_i32 = arith.constant 0 : i32
    %c0_i32_0 = arith.constant 0 : i32
    %c0_i32_1 = arith.constant 0 : i32
    return %c0_i32, %c0_i32_0 : i32, i32
  }
  func.func @transform_9(%arg0: i32) -> (i32, i32) {
    %c0_i32 = arith.constant 0 : i32
    %c0_i32_0 = arith.constant 0 : i32
    %c0_i32_1 = arith.constant 0 : i32
    return %c0_i32, %c0_i32_0 : i32, i32
  }
  func.func @transform_10(%arg0: i32) -> (i32, i32, i32) {
    %c0_i32 = arith.constant 0 : i32
    %c0_i32_0 = arith.constant 0 : i32
    %c0_i32_1 = arith.constant 0 : i32
    return %arg0, %c0_i32, %c0_i32_0 : i32, i32, i32
  }
}

</mosaic_0001>

<llo_original>
// kernel: tpu_custom_call.1
$region0: #{tpu_custom_call.1}
  #allocation0 [shape = 'u32[]', space=smem, size = 0x4, offset = 0x4, fixed_abs, tag = 'smem constant byte address 0x4 - core index']
  #allocation1 [shape = 'u32[144,128]{1,0:T(1,128)}', space=vmem, size = 0x12000, scoped, tag = 'internal scratch']
  %s0 = inlined_call_operand.hbm [shape: bf16[2,8,26], index: 0, kind: input, shape index: {}]
  %s1 = inlined_call_operand.hbm [shape: bf16[2,8,24], index: 1, kind: input, shape index: {}]
  %s2 = inlined_call_operand.vmem [shape: bf16[3,8,8], index: 2, kind: input, shape index: {}]
  %s3 = inlined_call_operand.hbm [shape: f32[8,24], index: 3, kind: input, shape index: {}]
  %s4 = inlined_call_operand.vmem [shape: bf16[3,8,8], index: 4, kind: input, shape index: {}]
  %s5 = inlined_call_operand.vmem [shape: bf16[3,8,8], index: 5, kind: input, shape index: {}]
  %s6 = inlined_call_operand.vmem [shape: f32[8,1], index: 6, kind: input, shape index: {}]
  %s7 = inlined_call_operand.hbm [shape: bf16[3,8,8], index: 7, kind: input, shape index: {}]
  %s8 = inlined_call_operand.vmem [shape: f32[8,1], index: 8, kind: input, shape index: {}]
  %s9 = inlined_call_operand.vmem [shape: f32[1,22], index: 9, kind: input, shape index: {}]
  %s10 = inlined_call_operand.hbm [shape: f32[2,4,20], index: 10, kind: output, shape index: {}]
  %s11 = sld [smem:[#allocation0]]
  $region89: #{tpu_custom_call.1} parent=0
    _
  %s13 = ssub.s32 1, %s11
  %s14 = scalar_select 0, %s13, %s11
  $region1: #{tpu_custom_call.1} parent=0
    #allocation2 [shape = 'u8[4096]{0}', space=vmem, size = 0x1000, scoped, tag = 'input window, operand 0']
    #allocation3 [shape = 's32[2]{0}', space=sflag, size = 0x8, scoped, tag = 'scoped memory for tpu_custom_call.1']
    #allocation4 [shape = 's32[2]{0}', space=sflag, size = 0x8, scoped, tag = 'scoped memory for tpu_custom_call.1']
    #allocation5 [shape = 'u8[4096]{0}', space=vmem, size = 0x1000, scoped, tag = 'input window, operand 1']
    #allocation6 [shape = 's32[2]{0}', space=sflag, size = 0x8, scoped, tag = 'scoped memory for tpu_custom_call.1']
    #allocation7 [shape = 'u8[4096]{0}', space=vmem, size = 0x1000, scoped, tag = 'input window, operand 3, single buffered']
    #allocation8 [shape = 'u8[6144]{0}', space=vmem, size = 0x1800, scoped, tag = 'input window, operand 7, single buffered']
    #allocation9 [shape = 's32[1]{0}', space=sflag, size = 0x4, scoped, tag = 'scoped memory for tpu_custom_call.1']
    #allocation10 [shape = 'u8[4096]{0}', space=vmem, size = 0x1000, scoped, tag = 'output window, operand 0']
    %15 = vsyncpa [#allocation3], 0
    %s16 = scalar_lea.sflag [#allocation3], 1
    %17 = vsyncpa %s16, 0
    %18 = vsyncpa [#allocation6], 0
    %s19 = scalar_lea.sflag [#allocation6], 1
    %20 = vsyncpa %s19, 0
    %21 = vsyncpa [#allocation9], 0
    %22 = vsyncpa [#allocation4], 0
    %s23 = scalar_lea.sflag [#allocation4], 1
    %24 = vsyncpa %s23, 0
    loop: start=0, step=1, limit=4
    $region2: #{tpu_custom_call.1} parent=1 // loop_pre_header
      _
    $region3: #{tpu_custom_call.1} parent=1 // loop_header
      %s26 = sphi 0, %s30
      %p27 = scmp.ge.s32.totalorder %s26, 4
      %s36 = sphi 0, %s38
      %s39 = sphi 0, %s36
      %s40 = sphi 0, %s39
      %s56 = sphi 0, %s40
      %s62 = sphi 0, %s64
      %s65 = sphi 0, %s62
      %s66 = sphi 0, %s65
      %s82 = sphi 0, %s66
      %s86 = sphi 0, %s86
      %s88 = sphi 0, %s86
      %s89 = sphi 0, %s88
      %s103 = sphi 0, %s89
      %s107 = sphi 0, %s107
      %s109 = sphi 0, %s107
      %s110 = sphi 0, %s109
      %s124 = sphi 0, %s110
      %s128 = sphi 0, %s128
      %s130 = sphi 0, %s128
      %s131 = sphi 0, %s130
      %s145 = sphi 0, %s131
      %s149 = sphi 0, %s149
      %s151 = sphi 0, %s149
      %s152 = sphi 0, %s151
      %s166 = sphi 0, %s152
      %s170 = sphi 0, %s170
      %s172 = sphi 0, %s170
      %s173 = sphi 0, %s172
      %s187 = sphi 0, %s173
      %s191 = sphi 0, %s191
      %s193 = sphi 0, %s191
      %s194 = sphi 0, %s193
      %s208 = sphi 0, %s194
      %s212 = sphi 0, %s212
      %s214 = sphi 0, %s212
      %s215 = sphi 0, %s214
      %s229 = sphi 0, %s215
      %s233 = sphi 0, %s233
      %s235 = sphi 0, %s233
      %s236 = sphi 0, %s235
      %s250 = sphi 0, %s236
      %s256 = sphi 0, %s258
      %s259 = sphi 0, %s256
      %s260 = sphi 0, %s259
      %s276 = sphi 0, %s260
    $region4: #{tpu_custom_call.1} parent=1 // loop_header_branch
      %29 = sbr.rel (%p27) target = $region8
    $region5: #{tpu_custom_call.1} parent=1 // loop_body
      %s31 = ssub.s32 %s26, 1
      %s32 = ssub.s32 %s26, 2
      %s33 = sadd.s32 %s26, 1
      %s34 = ssub.s32 %s26, %s33
      %p35 = scmp.eq.s32.totalorder %s34, 0
      %s37 = sadd.s32 %s36, 1
      %s38 = scalar_select %p35, %s36, %s37
      %p41 = pneg %p35
      %p42 = scmp.eq.s32.totalorder %s26, 1
      %p43 = por %p41, %p42
      %p44 = scmp.ne.s32.totalorder %s36, %s39
      %p45 = scmp.eq.s32.totalorder %s26, 0
      %p46 = por %p44, %p45
      %p47 = scmp.ne.s32.totalorder %s36, %s39
      %p48 = scmp.eq.s32.totalorder %s31, 1
      %p49 = por %p47, %p48
      %p50 = scmp.ne.s32.totalorder %s39, %s40
      %p51 = scmp.eq.s32.totalorder %s31, 0
      %p52 = por %p50, %p51
      %p53 = scmp.ne.s32.totalorder %s39, %s40
      %p54 = scmp.eq.s32.totalorder %s32, 1
      %p55 = por %p53, %p54
      %p57 = scmp.ne.s32.totalorder %s40, %s56
      %p58 = scmp.eq.s32.totalorder %s32, 0
      %p59 = por %p57, %p58
      %s60 = ssub.s32 %s26, %s33
      %p61 = scmp.eq.s32.totalorder %s60, 0
      %s63 = sadd.s32 %s62, 1
      %s64 = scalar_select %p61, %s62, %s63
      %p67 = pneg %p61
      %p68 = scmp.eq.s32.totalorder %s26, 1
      %p69 = por %p67, %p68
      %p70 = scmp.ne.s32.totalorder %s62, %s65
      %p71 = scmp.eq.s32.totalorder %s26, 0
      %p72 = por %p70, %p71
      %p73 = scmp.ne.s32.totalorder %s62, %s65
      %p74 = scmp.eq.s32.totalorder %s31, 1
      %p75 = por %p73, %p74
      %p76 = scmp.ne.s32.totalorder %s65, %s66
      %p77 = scmp.eq.s32.totalorder %s31, 0
      %p78 = por %p76, %p77
      %p79 = scmp.ne.s32.totalorder %s65, %s66
      %p80 = scmp.eq.s32.totalorder %s32, 1
      %p81 = por %p79, %p80
      %p83 = scmp.ne.s32.totalorder %s66, %s82
      %p84 = scmp.eq.s32.totalorder %s32, 0
      %p85 = por %p83, %p84
      %s87 = sadd.s32 %s86, 1
      %p90 = scmp.eq.s32.totalorder %s26, 1
      %p91 = scmp.ne.s32.totalorder %s86, %s88
      %p92 = scmp.eq.s32.totalorder %s26, 0
      %p93 = por %p91, %p92
      %p94 = scmp.ne.s32.totalorder %s86, %s88
      %p95 = scmp.eq.s32.totalorder %s31, 1
      %p96 = por %p94, %p95
      %p97 = scmp.ne.s32.totalorder %s88, %s89
      %p98 = scmp.eq.s32.totalorder %s31, 0
      %p99 = por %p97, %p98
      %p100 = scmp.ne.s32.totalorder %s88, %s89
      %p101 = scmp.eq.s32.totalorder %s32, 1
      %p102 = por %p100, %p101
      %p104 = scmp.ne.s32.totalorder %s89, %s103
      %p105 = scmp.eq.s32.totalorder %s32, 0
      %p106 = por %p104, %p105
      %s108 = sadd.s32 %s107, 1
      %p111 = scmp.eq.s32.totalorder %s26, 1
      %p112 = scmp.ne.s32.totalorder %s107, %s109
      %p113 = scmp.eq.s32.totalorder %s26, 0
      %p114 = por %p112, %p113
      %p115 = scmp.ne.s32.totalorder %s107, %s109
      %p116 = scmp.eq.s32.totalorder %s31, 1
      %p117 = por %p115, %p116
      %p118 = scmp.ne.s32.totalorder %s109, %s110
      %p119 = scmp.eq.s32.totalorder %s31, 0
      %p120 = por %p118, %p119
      %p121 = scmp.ne.s32.totalorder %s109, %s110
      %p122 = scmp.eq.s32.totalorder %s32, 1
      %p123 = por %p121, %p122
      %p125 = scmp.ne.s32.totalorder %s110, %s124
      %p126 = scmp.eq.s32.totalorder %s32, 0
      %p127 = por %p125, %p126
      %s129 = sadd.s32 %s128, 1
      %p132 = scmp.eq.s32.totalorder %s26, 1
      %p133 = scmp.ne.s32.totalorder %s128, %s130
      %p134 = scmp.eq.s32.totalorder %s26, 0
      %p135 = por %p133, %p134
      %p136 = scmp.ne.s32.totalorder %s128, %s130
      %p137 = scmp.eq.s32.totalorder %s31, 1
      %p138 = por %p136, %p137
      %p139 = scmp.ne.s32.totalorder %s130, %s131
      %p140 = scmp.eq.s32.totalorder %s31, 0
      %p141 = por %p139, %p140
      %p142 = scmp.ne.s32.totalorder %s130, %s131
      %p143 = scmp.eq.s32.totalorder %s32, 1
      %p144 = por %p142, %p143
      %p146 = scmp.ne.s32.totalorder %s131, %s145
      %p147 = scmp.eq.s32.totalorder %s32, 0
      %p148 = por %p146, %p147
      %s150 = sadd.s32 %s149, 1
      %p153 = scmp.eq.s32.totalorder %s26, 1
      %p154 = scmp.ne.s32.totalorder %s149, %s151
      %p155 = scmp.eq.s32.totalorder %s26, 0
      %p156 = por %p154, %p155
      %p157 = scmp.ne.s32.totalorder %s149, %s151
      %p158 = scmp.eq.s32.totalorder %s31, 1
      %p159 = por %p157, %p158
      %p160 = scmp.ne.s32.totalorder %s151, %s152
      %p161 = scmp.eq.s32.totalorder %s31, 0
      %p162 = por %p160, %p161
      %p163 = scmp.ne.s32.totalorder %s151, %s152
      %p164 = scmp.eq.s32.totalorder %s32, 1
      %p165 = por %p163, %p164
      %p167 = scmp.ne.s32.totalorder %s152, %s166
      %p168 = scmp.eq.s32.totalorder %s32, 0
      %p169 = por %p167, %p168
      %s171 = sadd.s32 %s170, 1
      %p174 = scmp.eq.s32.totalorder %s26, 1
      %p175 = scmp.ne.s32.totalorder %s170, %s172
      %p176 = scmp.eq.s32.totalorder %s26, 0
      %p177 = por %p175, %p176
      %p178 = scmp.ne.s32.totalorder %s170, %s172
      %p179 = scmp.eq.s32.totalorder %s31, 1
      %p180 = por %p178, %p179
      %p181 = scmp.ne.s32.totalorder %s172, %s173
      %p182 = scmp.eq.s32.totalorder %s31, 0
      %p183 = por %p181, %p182
      %p184 = scmp.ne.s32.totalorder %s172, %s173
      %p185 = scmp.eq.s32.totalorder %s32, 1
      %p186 = por %p184, %p185
      %p188 = scmp.ne.s32.totalorder %s173, %s187
      %p189 = scmp.eq.s32.totalorder %s32, 0
      %p190 = por %p188, %p189
      %s192 = sadd.s32 %s191, 1
      %p195 = scmp.eq.s32.totalorder %s26, 1
      %p196 = scmp.ne.s32.totalorder %s191, %s193
      %p197 = scmp.eq.s32.totalorder %s26, 0
      %p198 = por %p196, %p197
      %p199 = scmp.ne.s32.totalorder %s191, %s193
      %p200 = scmp.eq.s32.totalorder %s31, 1
      %p201 = por %p199, %p200
      %p202 = scmp.ne.s32.totalorder %s193, %s194
      %p203 = scmp.eq.s32.totalorder %s31, 0
      %p204 = por %p202, %p203
      %p205 = scmp.ne.s32.totalorder %s193, %s194
      %p206 = scmp.eq.s32.totalorder %s32, 1
      %p207 = por %p205, %p206
      %p209 = scmp.ne.s32.totalorder %s194, %s208
      %p210 = scmp.eq.s32.totalorder %s32, 0
      %p211 = por %p209, %p210
      %s213 = sadd.s32 %s212, 1
      %p216 = scmp.eq.s32.totalorder %s26, 1
      %p217 = scmp.ne.s32.totalorder %s212, %s214
      %p218 = scmp.eq.s32.totalorder %s26, 0
      %p219 = por %p217, %p218
      %p220 = scmp.ne.s32.totalorder %s212, %s214
      %p221 = scmp.eq.s32.totalorder %s31, 1
      %p222 = por %p220, %p221
      %p223 = scmp.ne.s32.totalorder %s214, %s215
      %p224 = scmp.eq.s32.totalorder %s31, 0
      %p225 = por %p223, %p224
      %p226 = scmp.ne.s32.totalorder %s214, %s215
      %p227 = scmp.eq.s32.totalorder %s32, 1
      %p228 = por %p226, %p227
      %p230 = scmp.ne.s32.totalorder %s215, %s229
      %p231 = scmp.eq.s32.totalorder %s32, 0
      %p232 = por %p230, %p231
      %s234 = sadd.s32 %s233, 1
      %p237 = scmp.eq.s32.totalorder %s26, 1
      %p238 = scmp.ne.s32.totalorder %s233, %s235
      %p239 = scmp.eq.s32.totalorder %s26, 0
      %p240 = por %p238, %p239
      %p241 = scmp.ne.s32.totalorder %s233, %s235
      %p242 = scmp.eq.s32.totalorder %s31, 1
      %p243 = por %p241, %p242
      %p244 = scmp.ne.s32.totalorder %s235, %s236
      %p245 = scmp.eq.s32.totalorder %s31, 0
      %p246 = por %p244, %p245
      %p247 = scmp.ne.s32.totalorder %s235, %s236
      %p248 = scmp.eq.s32.totalorder %s32, 1
      %p249 = por %p247, %p248
      %p251 = scmp.ne.s32.totalorder %s236, %s250
      %p252 = scmp.eq.s32.totalorder %s32, 0
      %p253 = por %p251, %p252
      %s254 = ssub.s32 %s26, %s33
      %p255 = scmp.eq.s32.totalorder %s254, 0
      %s257 = sadd.s32 %s256, 1
      %s258 = scalar_select %p255, %s256, %s257
      %p261 = pneg %p255
      %p262 = scmp.eq.s32.totalorder %s26, 1
      %p263 = por %p261, %p262
      %p264 = scmp.ne.s32.totalorder %s256, %s259
      %p265 = scmp.eq.s32.totalorder %s26, 0
      %p266 = por %p264, %p265
      %p267 = scmp.ne.s32.totalorder %s256, %s259
      %p268 = scmp.eq.s32.totalorder %s31, 1
      %p269 = por %p267, %p268
      %p270 = scmp.ne.s32.totalorder %s259, %s260
      %p271 = scmp.eq.s32.totalorder %s31, 0
      %p272 = por %p270, %p271
      %p273 = scmp.ne.s32.totalorder %s259, %s260
      %p274 = scmp.eq.s32.totalorder %s32, 1
      %p275 = por %p273, %p274
      %p277 = scmp.ne.s32.totalorder %s260, %s276
      %p278 = scmp.eq.s32.totalorder %s32, 0
      %p279 = por %p277, %p278
      %p280 = scmp.le.s32.totalorder 1, %s26
      %p281 = scmp.lt.s32.totalorder %s26, 3
      %p282 = pnand %p280, %p281
      %p283 = pneg %p282
      // Predicated region
      $region9: #{tpu_custom_call.1} parent=5 // pred_check
        _
      $region10: #{tpu_custom_call.1} parent=5 // pred_check_branch
        %285 = sbr.rel (%p282) target = $region12
      $region11: #{tpu_custom_call.1} parent=5 // pred_region
        %s286 = ssub.s32 %s26, 1
        // Predicated region
        $region13: #{tpu_custom_call.1} parent=11 // pred_check
          %p287 = pneg %p99
        $region14: #{tpu_custom_call.1} parent=11 // pred_check_branch
          %289 = sbr.rel (%p287) target = $region16
        $region15: #{tpu_custom_call.1} parent=11 // pred_region
          _
        $region16: #{tpu_custom_call.1} parent=11 // pred_fallthru
          _
        // Predicated region
        $region17: #{tpu_custom_call.1} parent=11 // pred_check
          %p290 = pneg %p120
        $region18: #{tpu_custom_call.1} parent=11 // pred_check_branch
          %292 = sbr.rel (%p290) target = $region20
        $region19: #{tpu_custom_call.1} parent=11 // pred_region
          %s294 = ssub.s32 128, 128
          %295 = vsyncadd [#allocation6], %s294
          %s297 = sshll.u32 [#allocation7], 4
          %s298 = int_to_ptr.vmem [resolvable:$true] %s297
          %300 = dma.hbm_to_vmem [thread:$0]  %s3, 128, %s298, [#allocation6]
        $region20: #{tpu_custom_call.1} parent=11 // pred_fallthru
          _
        // Predicated region
        $region21: #{tpu_custom_call.1} parent=11 // pred_check
          %p301 = pneg %p141
        $region22: #{tpu_custom_call.1} parent=11 // pred_check_branch
          %303 = sbr.rel (%p301) target = $region24
        $region23: #{tpu_custom_call.1} parent=11 // pred_region
          _
        $region24: #{tpu_custom_call.1} parent=11 // pred_fallthru
          _
        // Predicated region
        $region25: #{tpu_custom_call.1} parent=11 // pred_check
          %p304 = pneg %p162
        $region26: #{tpu_custom_call.1} parent=11 // pred_check_branch
          %306 = sbr.rel (%p304) target = $region28
        $region27: #{tpu_custom_call.1} parent=11 // pred_region
          _
        $region28: #{tpu_custom_call.1} parent=11 // pred_fallthru
          _
        // Predicated region
        $region29: #{tpu_custom_call.1} parent=11 // pred_check
          %p307 = pneg %p183
        $region30: #{tpu_custom_call.1} parent=11 // pred_check_branch
          %309 = sbr.rel (%p307) target = $region32
        $region31: #{tpu_custom_call.1} parent=11 // pred_region
          _
        $region32: #{tpu_custom_call.1} parent=11 // pred_fallthru
          _
        // Predicated region
        $region33: #{tpu_custom_call.1} parent=11 // pred_check
          %p310 = pneg %p204
        $region34: #{tpu_custom_call.1} parent=11 // pred_check_branch
          %312 = sbr.rel (%p310) target = $region36
        $region35: #{tpu_custom_call.1} parent=11 // pred_region
          %s314 = ssub.s32 192, 192
          %315 = vsyncadd [#allocation9], %s314
          %s316 = sshll.u32 [#allocation8], 4
          %s317 = int_to_ptr.vmem [resolvable:$true] %s316
          %322 = dma.hbm_to_vmem [thread:$0]  %s7, 192, %s317, [#allocation9], 64, 64, 4
        $region36: #{tpu_custom_call.1} parent=11 // pred_fallthru
          _
        // Predicated region
        $region37: #{tpu_custom_call.1} parent=11 // pred_check
          %p323 = pneg %p225
        $region38: #{tpu_custom_call.1} parent=11 // pred_check_branch
          %325 = sbr.rel (%p323) target = $region40
        $region39: #{tpu_custom_call.1} parent=11 // pred_region
          _
        $region40: #{tpu_custom_call.1} parent=11 // pred_fallthru
          _
        // Predicated region
        $region41: #{tpu_custom_call.1} parent=11 // pred_check
          %p326 = pneg %p246
        $region42: #{tpu_custom_call.1} parent=11 // pred_check_branch
          %328 = sbr.rel (%p326) target = $region44
        $region43: #{tpu_custom_call.1} parent=11 // pred_region
          _
        $region44: #{tpu_custom_call.1} parent=11 // pred_fallthru
          _
      $region12: #{tpu_custom_call.1} parent=5 // pred_fallthru
        _
      %p329 = scmp.lt.s32.totalorder %s26, 2
      // Predicated region
      $region45: #{tpu_custom_call.1} parent=5 // pred_check
        %p330 = pneg %p329
      $region46: #{tpu_custom_call.1} parent=5 // pred_check_branch
        %332 = sbr.rel (%p330) target = $region48
      $region47: #{tpu_custom_call.1} parent=5 // pred_region
        // Predicated region
        $region49: #{tpu_custom_call.1} parent=47 // pred_check
          %p333 = pneg %p46
        $region50: #{tpu_custom_call.1} parent=47 // pred_check_branch
          %335 = sbr.rel (%p333) target = $region52
        $region51: #{tpu_custom_call.1} parent=47 // pred_region
          %s336 = sand.u32 %s36, 1
          %s337 = scalar_lea.sflag [#allocation3], %s336
          %s338 = sand.u32 %s36, 1
          %s339 = smul.addr %s338, 4
          %s340 = scalar_lea.vmem [#allocation2], %s339
          %s342 = ssub.s32 64, 64
          %343 = vsyncadd %s337, %s342
          %s344 = smul.addr %s26, 64
          %s345 = scalar_lea.hbm %s0, %s344
          %s347 = sshll.u32 %s340, 4
          %s348 = int_to_ptr.vmem [resolvable:$true] %s347
          %350 = dma.hbm_to_vmem [thread:$0]  %s345, 64, %s348, %s337
        $region52: #{tpu_custom_call.1} parent=47 // pred_fallthru
          _
        // Predicated region
        $region53: #{tpu_custom_call.1} parent=47 // pred_check
          %p351 = pneg %p72
        $region54: #{tpu_custom_call.1} parent=47 // pred_check_branch
          %353 = sbr.rel (%p351) target = $region56
        $region55: #{tpu_custom_call.1} parent=47 // pred_region
          %s354 = sand.u32 %s26, 1
          %s355 = scalar_lea.sflag [#allocation6], %s354
          %s356 = sand.u32 %s62, 1
          %s357 = smul.addr %s356, 4
          %s358 = scalar_lea.vmem [#allocation5], %s357
          %s360 = ssub.s32 64, 64
          %361 = vsyncadd %s355, %s360
          %s362 = smul.addr %s26, 64
          %s363 = scalar_lea.hbm %s1, %s362
          %s365 = sshll.u32 %s358, 4
          %s366 = int_to_ptr.vmem [resolvable:$true] %s365
          %368 = dma.hbm_to_vmem [thread:$0]  %s363, 64, %s366, %s355
        $region56: #{tpu_custom_call.1} parent=47 // pred_fallthru
          _
      $region48: #{tpu_custom_call.1} parent=5 // pred_fallthru
        _
      %p369 = scmp.le.s32.totalorder 1, %s26
      %p370 = scmp.lt.s32.totalorder %s26, 3
      %p371 = pnand %p369, %p370
      %p372 = pneg %p371
      // Predicated region
      $region57: #{tpu_custom_call.1} parent=5 // pred_check
        _
      $region58: #{tpu_custom_call.1} parent=5 // pred_check_branch
        %374 = sbr.rel (%p371) target = $region60
      $region59: #{tpu_custom_call.1} parent=5 // pred_region
        %s375 = ssub.s32 %s26, 1
        %s376 = sand.u32 %s39, 1
        %s377 = scalar_lea.sflag [#allocation3], %s376
        %s378 = sand.u32 %s39, 1
        %s379 = smul.addr %s378, 4
        %s380 = scalar_lea.vmem [#allocation2], %s379
        // Predicated region
        $region61: #{tpu_custom_call.1} parent=59 // pred_check
          %p381 = pneg %p52
        $region62: #{tpu_custom_call.1} parent=59 // pred_check_branch
          %383 = sbr.rel (%p381) target = $region64
        $region63: #{tpu_custom_call.1} parent=59 // pred_region
          %384 = dma.done %s377, 64
        $region64: #{tpu_custom_call.1} parent=59 // pred_fallthru
          _
        %s385 = sand.u32 %s31, 1
        %s386 = scalar_lea.sflag [#allocation6], %s385
        %s387 = sand.u32 %s65, 1
        %s388 = smul.addr %s387, 4
        %s389 = scalar_lea.vmem [#allocation5], %s388
        // Predicated region
        $region65: #{tpu_custom_call.1} parent=59 // pred_check
          %p390 = pneg %p78
        $region66: #{tpu_custom_call.1} parent=59 // pred_check_branch
          %392 = sbr.rel (%p390) target = $region68
        $region67: #{tpu_custom_call.1} parent=59 // pred_region
          %393 = dma.done %s386, 64
        $region68: #{tpu_custom_call.1} parent=59 // pred_fallthru
          _
        // Predicated region
        $region69: #{tpu_custom_call.1} parent=59 // pred_check
          %p394 = pneg %p120
        $region70: #{tpu_custom_call.1} parent=59 // pred_check_branch
          %396 = sbr.rel (%p394) target = $region72
        $region71: #{tpu_custom_call.1} parent=59 // pred_region
          %397 = dma.done [#allocation6], 128
        $region72: #{tpu_custom_call.1} parent=59 // pred_fallthru
          _
        // Predicated region
        $region73: #{tpu_custom_call.1} parent=59 // pred_check
          %p398 = pneg %p204
        $region74: #{tpu_custom_call.1} parent=59 // pred_check_branch
          %400 = sbr.rel (%p398) target = $region76
        $region75: #{tpu_custom_call.1} parent=59 // pred_region
          %401 = dma.done [#allocation9], 192
        $region76: #{tpu_custom_call.1} parent=59 // pred_fallthru
          _
        %s402 = sand.u32 %s39, 1
        %s403 = scalar_lea.sflag [#allocation3], %s402
        %s404 = sand.u32 %s39, 1
        %s405 = smul.addr %s404, 4
        %s406 = scalar_lea.vmem [#allocation2], %s405
        %p407 = pneg %p52
        %p408 = pneg %p49
        %s409 = sand.u32 %s31, 1
        %s410 = scalar_lea.sflag [#allocation6], %s409
        %s411 = sand.u32 %s65, 1
        %s412 = smul.addr %s411, 4
        %s413 = scalar_lea.vmem [#allocation5], %s412
        %p414 = pneg %p78
        %p415 = pneg %p75
        %p416 = pneg %p99
        %p417 = pneg %p96
        %p418 = pneg %p120
        %p419 = pneg %p117
        %p420 = pneg %p141
        %p421 = pneg %p138
        %p422 = pneg %p162
        %p423 = pneg %p159
        %p424 = pneg %p183
        %p425 = pneg %p180
        %p426 = pneg %p204
        %p427 = pneg %p201
        %p428 = pneg %p225
        %p429 = pneg %p222
        %p430 = pneg %p246
        %p431 = pneg %p243
        %p432 = pneg %p272
        %p433 = pneg %p269
        %s434 = sand.u32 %s259, 1
        %s435 = scalar_lea.sflag [#allocation4], %s434
        %s436 = sand.u32 %s259, 1
        %s437 = smul.addr %s436, 4
        %s438 = scalar_lea.vmem [#allocation10], %s437
        %v440 = vld [vmem:[%s380] sm:$0xf]
        %v441 = vld [vmem:[%s389] sm:$0xf]
        %v442 = vld [vmem:[%s2] sm:$0xf]
        %s443 = scalar_lea.vmem %s2, 4
        %v444 = vld [vmem:[%s443] sm:$0xf]
        %v446 = vunpack.c.l.b16 %v440
        %v447 = vpack.c.b16 %v446, %v446
        %448 = vrot.lane.b32.xlu0 %v447, 127
        %v449 = vpop.permute.xlu0 %448
        %vm450 = vcmask 64512
        %v452 = vsel %vm450, %v444, 0
        %vm454 = vcmask 1043456
        %v456 = vsel %vm454, %v449, 0
        %458 = vmatprep.subr.bf16.mxu0 0
        %459 = vmatpush1.bf16.msra.mxu0 %v456
        %460 = vmatprep.subr.bf16.mxu0 0
        %461 = vmatpush1.bf16.msra.mxu0 0
        %462 = vmatprep.subr.bf16.mxu0 0
        %463 = vmatpush1.bf16.msra.mxu0 0
        %464 = vmatprep.subr.bf16.mxu0 0
        %465 = vmatpush1.bf16.msra.mxu0 0
        %466 = vmatprep.subr.bf16.mxu0 0
        %467 = vmatpush1.bf16.msra.mxu0 0
        %468 = vmatprep.subr.bf16.mxu0 0
        %469 = vmatpush1.bf16.msra.mxu0 0
        %470 = vmatprep.subr.bf16.mxu0 0
        %471 = vmatpush1.bf16.msra.mxu0 0
        %472 = vmatprep.subr.bf16.mxu0 0
        %473 = vmatpush1.bf16.msra.mxu0 0
        %474 = vmatprep.subr.bf16.mxu0 0
        %475 = vmatpush1.bf16.msra.mxu0 0
        %476 = vmatprep.subr.bf16.mxu0 0
        %477 = vmatpush1.bf16.msra.mxu0 0
        %478 = vmatprep.subr.bf16.mxu0 0
        %479 = vmatpush1.bf16.msra.mxu0 0
        %480 = vmatprep.subr.bf16.mxu0 0
        %481 = vmatpush1.bf16.msra.mxu0 0
        %482 = vmatprep.subr.bf16.mxu0 0
        %483 = vmatpush1.bf16.msra.mxu0 0
        %484 = vmatprep.subr.bf16.mxu0 0
        %485 = vmatpush1.bf16.msra.mxu0 0
        %486 = vmatprep.subr.bf16.mxu0 0
        %487 = vmatpush1.bf16.msra.mxu0 0
        %488 = vmatprep.subr.bf16.mxu0 0
        %489 = vmatpush1.bf16.msra.mxu0 0
        %490 = vmatprep.mubr.bf16.mxu0 0
        %491 = vmatmul.mubr.bf16.gmra.mrb[0].mxu0 %v452
        %v492 = vpop.f32.mrb[0].mxu0
        %v493 = vadd.f32 0.0, %v492
        %v494 = vpop.f32.mrb[0].mxu0
        %v495 = vpop.f32.mrb[0].mxu0
        %v496 = vpop.f32.mrb[0].mxu0
        %497 = vdwg.mxu0
        %v499 = vsel %vm450, %v442, 0
        %v502 = vsel %vm454, %v440, 0
        %504 = vmatprep.subr.bf16.mxu0 0
        %505 = vmatpush1.bf16.msra.mxu0 %v502
        %506 = vmatprep.subr.bf16.mxu0 0
        %507 = vmatpush1.bf16.msra.mxu0 0
        %508 = vmatprep.subr.bf16.mxu0 0
        %509 = vmatpush1.bf16.msra.mxu0 0
        %510 = vmatprep.subr.bf16.mxu0 0
        %511 = vmatpush1.bf16.msra.mxu0 0
        %512 = vmatprep.subr.bf16.mxu0 0
        %513 = vmatpush1.bf16.msra.mxu0 0
        %514 = vmatprep.subr.bf16.mxu0 0
        %515 = vmatpush1.bf16.msra.mxu0 0
        %516 = vmatprep.subr.bf16.mxu0 0
        %517 = vmatpush1.bf16.msra.mxu0 0
        %518 = vmatprep.subr.bf16.mxu0 0
        %519 = vmatpush1.bf16.msra.mxu0 0
        %520 = vmatprep.subr.bf16.mxu0 0
        %521 = vmatpush1.bf16.msra.mxu0 0
        %522 = vmatprep.subr.bf16.mxu0 0
        %523 = vmatpush1.bf16.msra.mxu0 0
        %524 = vmatprep.subr.bf16.mxu0 0
        %525 = vmatpush1.bf16.msra.mxu0 0
        %526 = vmatprep.subr.bf16.mxu0 0
        %527 = vmatpush1.bf16.msra.mxu0 0
        %528 = vmatprep.subr.bf16.mxu0 0
        %529 = vmatpush1.bf16.msra.mxu0 0
        %530 = vmatprep.subr.bf16.mxu0 0
        %531 = vmatpush1.bf16.msra.mxu0 0
        %532 = vmatprep.subr.bf16.mxu0 0
        %533 = vmatpush1.bf16.msra.mxu0 0
        %534 = vmatprep.subr.bf16.mxu0 0
        %535 = vmatpush1.bf16.msra.mxu0 0
        %536 = vmatprep.mubr.bf16.mxu0 0
        %537 = vmatmul.mubr.bf16.gmra.mrb[0].mxu0 %v499
        %v538 = vpop.f32.mrb[0].mxu0
        %v539 = vadd.f32 %v493, %v538
        %v540 = vpop.f32.mrb[0].mxu0
        %v541 = vpop.f32.mrb[0].mxu0
        %v542 = vpop.f32.mrb[0].mxu0
        %543 = vdwg.mxu0
        %s544 = scalar_lea.vmem %s2, 8
        %v545 = vld [vmem:[%s544] sm:$0xf]
        %546 = vrot.lane.b32.xlu0 %v447, 126
        %v547 = vpop.permute.xlu0 %546
        %v549 = vsel %vm450, %v545, 0
        %v552 = vsel %vm454, %v547, 0
        %554 = vmatprep.subr.bf16.mxu0 0
        %555 = vmatpush1.bf16.msra.mxu0 %v552
        %556 = vmatprep.subr.bf16.mxu0 0
        %557 = vmatpush1.bf16.msra.mxu0 0
        %558 = vmatprep.subr.bf16.mxu0 0
        %559 = vmatpush1.bf16.msra.mxu0 0
        %560 = vmatprep.subr.bf16.mxu0 0
        %561 = vmatpush1.bf16.msra.mxu0 0
        %562 = vmatprep.subr.bf16.mxu0 0
        %563 = vmatpush1.bf16.msra.mxu0 0
        %564 = vmatprep.subr.bf16.mxu0 0
        %565 = vmatpush1.bf16.msra.mxu0 0
        %566 = vmatprep.subr.bf16.mxu0 0
        %567 = vmatpush1.bf16.msra.mxu0 0
        %568 = vmatprep.subr.bf16.mxu0 0
        %569 = vmatpush1.bf16.msra.mxu0 0
        %570 = vmatprep.subr.bf16.mxu0 0
        %571 = vmatpush1.bf16.msra.mxu0 0
        %572 = vmatprep.subr.bf16.mxu0 0
        %573 = vmatpush1.bf16.msra.mxu0 0
        %574 = vmatprep.subr.bf16.mxu0 0
        %575 = vmatpush1.bf16.msra.mxu0 0
        %576 = vmatprep.subr.bf16.mxu0 0
        %577 = vmatpush1.bf16.msra.mxu0 0
        %578 = vmatprep.subr.bf16.mxu0 0
        %579 = vmatpush1.bf16.msra.mxu0 0
        %580 = vmatprep.subr.bf16.mxu0 0
        %581 = vmatpush1.bf16.msra.mxu0 0
        %582 = vmatprep.subr.bf16.mxu0 0
        %583 = vmatpush1.bf16.msra.mxu0 0
        %584 = vmatprep.subr.bf16.mxu0 0
        %585 = vmatpush1.bf16.msra.mxu0 0
        %586 = vmatprep.mubr.bf16.mxu0 0
        %587 = vmatmul.mubr.bf16.gmra.mrb[0].mxu0 %v549
        %v588 = vpop.f32.mrb[0].mxu0
        %v589 = vadd.f32 0.0, %v588
        %v590 = vpop.f32.mrb[0].mxu0
        %v591 = vpop.f32.mrb[0].mxu0
        %v592 = vpop.f32.mrb[0].mxu0
        %593 = vdwg.mxu0
        %v594 = vadd.f32 %v539, %v589
        %v595 = vld [vmem:[#allocation7] sm:$0xff]
        %v596 = vadd.f32 %v594, %v595
        %v597 = vpack.c.bf16 %v596, %v596
        %v598 = vld [vmem:[%s4] sm:$0xf]
        %s599 = scalar_lea.vmem %s4, 4
        %v600 = vld [vmem:[%s599] sm:$0xf]
        %v602 = vunpack.c.l.b16 %v441
        %v603 = vpack.c.b16 %v602, %v602
        %604 = vrot.lane.b32.xlu0 %v603, 127
        %v605 = vpop.permute.xlu0 %604
        %v607 = vsel %vm450, %v600, 0
        %v610 = vsel %vm454, %v605, 0
        %612 = vmatprep.subr.bf16.mxu0 0
        %613 = vmatpush1.bf16.msra.mxu0 %v610
        %614 = vmatprep.subr.bf16.mxu0 0
        %615 = vmatpush1.bf16.msra.mxu0 0
        %616 = vmatprep.subr.bf16.mxu0 0
        %617 = vmatpush1.bf16.msra.mxu0 0
        %618 = vmatprep.subr.bf16.mxu0 0
        %619 = vmatpush1.bf16.msra.mxu0 0
        %620 = vmatprep.subr.bf16.mxu0 0
        %621 = vmatpush1.bf16.msra.mxu0 0
        %622 = vmatprep.subr.bf16.mxu0 0
        %623 = vmatpush1.bf16.msra.mxu0 0
        %624 = vmatprep.subr.bf16.mxu0 0
        %625 = vmatpush1.bf16.msra.mxu0 0
        %626 = vmatprep.subr.bf16.mxu0 0
        %627 = vmatpush1.bf16.msra.mxu0 0
        %628 = vmatprep.subr.bf16.mxu0 0
        %629 = vmatpush1.bf16.msra.mxu0 0
        %630 = vmatprep.subr.bf16.mxu0 0
        %631 = vmatpush1.bf16.msra.mxu0 0
        %632 = vmatprep.subr.bf16.mxu0 0
        %633 = vmatpush1.bf16.msra.mxu0 0
        %634 = vmatprep.subr.bf16.mxu0 0
        %635 = vmatpush1.bf16.msra.mxu0 0
        %636 = vmatprep.subr.bf16.mxu0 0
        %637 = vmatpush1.bf16.msra.mxu0 0
        %638 = vmatprep.subr.bf16.mxu0 0
        %639 = vmatpush1.bf16.msra.mxu0 0
        %640 = vmatprep.subr.bf16.mxu0 0
        %641 = vmatpush1.bf16.msra.mxu0 0
        %642 = vmatprep.subr.bf16.mxu0 0
        %643 = vmatpush1.bf16.msra.mxu0 0
        %644 = vmatprep.mubr.bf16.mxu0 0
        %645 = vmatmul.mubr.bf16.gmra.mrb[0].mxu0 %v607
        %v646 = vpop.f32.mrb[0].mxu0
        %v647 = vadd.f32 0.0, %v646
        %v648 = vpop.f32.mrb[0].mxu0
        %v649 = vpop.f32.mrb[0].mxu0
        %v650 = vpop.f32.mrb[0].mxu0
        %651 = vdwg.mxu0
        %v653 = vsel %vm450, %v598, 0
        %v656 = vsel %vm454, %v441, 0
        %658 = vmatprep.subr.bf16.mxu0 0
        %659 = vmatpush1.bf16.msra.mxu0 %v656
        %660 = vmatprep.subr.bf16.mxu0 0
        %661 = vmatpush1.bf16.msra.mxu0 0
        %662 = vmatprep.subr.bf16.mxu0 0
        %663 = vmatpush1.bf16.msra.mxu0 0
        %664 = vmatprep.subr.bf16.mxu0 0
        %665 = vmatpush1.bf16.msra.mxu0 0
        %666 = vmatprep.subr.bf16.mxu0 0
        %667 = vmatpush1.bf16.msra.mxu0 0
        %668 = vmatprep.subr.bf16.mxu0 0
        %669 = vmatpush1.bf16.msra.mxu0 0
        %670 = vmatprep.subr.bf16.mxu0 0
        %671 = vmatpush1.bf16.msra.mxu0 0
        %672 = vmatprep.subr.bf16.mxu0 0
        %673 = vmatpush1.bf16.msra.mxu0 0
        %674 = vmatprep.subr.bf16.mxu0 0
        %675 = vmatpush1.bf16.msra.mxu0 0
        %676 = vmatprep.subr.bf16.mxu0 0
        %677 = vmatpush1.bf16.msra.mxu0 0
        %678 = vmatprep.subr.bf16.mxu0 0
        %679 = vmatpush1.bf16.msra.mxu0 0
        %680 = vmatprep.subr.bf16.mxu0 0
        %681 = vmatpush1.bf16.msra.mxu0 0
        %682 = vmatprep.subr.bf16.mxu0 0
        %683 = vmatpush1.bf16.msra.mxu0 0
        %684 = vmatprep.subr.bf16.mxu0 0
        %685 = vmatpush1.bf16.msra.mxu0 0
        %686 = vmatprep.subr.bf16.mxu0 0
        %687 = vmatpush1.bf16.msra.mxu0 0
        %688 = vmatprep.subr.bf16.mxu0 0
        %689 = vmatpush1.bf16.msra.mxu0 0
        %690 = vmatprep.mubr.bf16.mxu0 0
        %691 = vmatmul.mubr.bf16.gmra.mrb[0].mxu0 %v653
        %v692 = vpop.f32.mrb[0].mxu0
        %v693 = vadd.f32 %v647, %v692
        %v694 = vpop.f32.mrb[0].mxu0
        %v695 = vpop.f32.mrb[0].mxu0
        %v696 = vpop.f32.mrb[0].mxu0
        %697 = vdwg.mxu0
        %s698 = scalar_lea.vmem %s4, 8
        %v699 = vld [vmem:[%s698] sm:$0xf]
        %700 = vrot.lane.b32.xlu0 %v603, 126
        %v701 = vpop.permute.xlu0 %700
        %v703 = vsel %vm450, %v699, 0
        %v706 = vsel %vm454, %v701, 0
        %708 = vmatprep.subr.bf16.mxu0 0
        %709 = vmatpush1.bf16.msra.mxu0 %v706
        %710 = vmatprep.subr.bf16.mxu0 0
        %711 = vmatpush1.bf16.msra.mxu0 0
        %712 = vmatprep.subr.bf16.mxu0 0
        %713 = vmatpush1.bf16.msra.mxu0 0
        %714 = vmatprep.subr.bf16.mxu0 0
        %715 = vmatpush1.bf16.msra.mxu0 0
        %716 = vmatprep.subr.bf16.mxu0 0
        %717 = vmatpush1.bf16.msra.mxu0 0
        %718 = vmatprep.subr.bf16.mxu0 0
        %719 = vmatpush1.bf16.msra.mxu0 0
        %720 = vmatprep.subr.bf16.mxu0 0
        %721 = vmatpush1.bf16.msra.mxu0 0
        %722 = vmatprep.subr.bf16.mxu0 0
        %723 = vmatpush1.bf16.msra.mxu0 0
        %724 = vmatprep.subr.bf16.mxu0 0
        %725 = vmatpush1.bf16.msra.mxu0 0
        %726 = vmatprep.subr.bf16.mxu0 0
        %727 = vmatpush1.bf16.msra.mxu0 0
        %728 = vmatprep.subr.bf16.mxu0 0
        %729 = vmatpush1.bf16.msra.mxu0 0
        %730 = vmatprep.subr.bf16.mxu0 0
        %731 = vmatpush1.bf16.msra.mxu0 0
        %732 = vmatprep.subr.bf16.mxu0 0
        %733 = vmatpush1.bf16.msra.mxu0 0
        %734 = vmatprep.subr.bf16.mxu0 0
        %735 = vmatpush1.bf16.msra.mxu0 0
        %736 = vmatprep.subr.bf16.mxu0 0
        %737 = vmatpush1.bf16.msra.mxu0 0
        %738 = vmatprep.subr.bf16.mxu0 0
        %739 = vmatpush1.bf16.msra.mxu0 0
        %740 = vmatprep.mubr.bf16.mxu0 0
        %741 = vmatmul.mubr.bf16.gmra.mrb[0].mxu0 %v703
        %v742 = vpop.f32.mrb[0].mxu0
        %v743 = vadd.f32 0.0, %v742
        %v744 = vpop.f32.mrb[0].mxu0
        %v745 = vpop.f32.mrb[0].mxu0
        %v746 = vpop.f32.mrb[0].mxu0
        %747 = vdwg.mxu0
        %v748 = vadd.f32 %v693, %v743
        %v749 = vld [vmem:[%s5] sm:$0xf]
        %v751 = vsel %vm450, %v749, 0
        %v754 = vsel %vm454, %v597, 0
        %756 = vmatprep.subr.bf16.mxu0 0
        %757 = vmatpush1.bf16.msra.mxu0 %v754
        %758 = vmatprep.subr.bf16.mxu0 0
        %759 = vmatpush1.bf16.msra.mxu0 0
        %760 = vmatprep.subr.bf16.mxu0 0
        %761 = vmatpush1.bf16.msra.mxu0 0
        %762 = vmatprep.subr.bf16.mxu0 0
        %763 = vmatpush1.bf16.msra.mxu0 0
        %764 = vmatprep.subr.bf16.mxu0 0
        %765 = vmatpush1.bf16.msra.mxu0 0
        %766 = vmatprep.subr.bf16.mxu0 0
        %767 = vmatpush1.bf16.msra.mxu0 0
        %768 = vmatprep.subr.bf16.mxu0 0
        %769 = vmatpush1.bf16.msra.mxu0 0
        %770 = vmatprep.subr.bf16.mxu0 0
        %771 = vmatpush1.bf16.msra.mxu0 0
        %772 = vmatprep.subr.bf16.mxu0 0
        %773 = vmatpush1.bf16.msra.mxu0 0
        %774 = vmatprep.subr.bf16.mxu0 0
        %775 = vmatpush1.bf16.msra.mxu0 0
        %776 = vmatprep.subr.bf16.mxu0 0
        %777 = vmatpush1.bf16.msra.mxu0 0
        %778 = vmatprep.subr.bf16.mxu0 0
        %779 = vmatpush1.bf16.msra.mxu0 0
        %780 = vmatprep.subr.bf16.mxu0 0
        %781 = vmatpush1.bf16.msra.mxu0 0
        %782 = vmatprep.subr.bf16.mxu0 0
        %783 = vmatpush1.bf16.msra.mxu0 0
        %784 = vmatprep.subr.bf16.mxu0 0
        %785 = vmatpush1.bf16.msra.mxu0 0
        %786 = vmatprep.subr.bf16.mxu0 0
        %787 = vmatpush1.bf16.msra.mxu0 0
        %788 = vmatprep.mubr.bf16.mxu0 0
        %789 = vmatmul.mubr.bf16.gmra.mrb[0].mxu0 %v751
        %v790 = vpop.f32.mrb[0].mxu0
        %v791 = vadd.f32 0.0, %v790
        %v792 = vpop.f32.mrb[0].mxu0
        %v793 = vpop.f32.mrb[0].mxu0
        %v794 = vpop.f32.mrb[0].mxu0
        %795 = vdwg.mxu0
        %v796 = vadd.f32 %v748, %v791
        %s797 = scalar_lea.vmem %s5, 4
        %v798 = vld [vmem:[%s797] sm:$0xf]
        %800 = vrot.lane.b32.xlu0 %v597, 127
        %v801 = vpop.permute.xlu0 %800
        %v803 = vsel %vm450, %v798, 0
        %v806 = vsel %vm454, %v801, 0
        %808 = vmatprep.subr.bf16.mxu0 0
        %809 = vmatpush1.bf16.msra.mxu0 %v806
        %810 = vmatprep.subr.bf16.mxu0 0
        %811 = vmatpush1.bf16.msra.mxu0 0
        %812 = vmatprep.subr.bf16.mxu0 0
        %813 = vmatpush1.bf16.msra.mxu0 0
        %814 = vmatprep.subr.bf16.mxu0 0
        %815 = vmatpush1.bf16.msra.mxu0 0
        %816 = vmatprep.subr.bf16.mxu0 0
        %817 = vmatpush1.bf16.msra.mxu0 0
        %818 = vmatprep.subr.bf16.mxu0 0
        %819 = vmatpush1.bf16.msra.mxu0 0
        %820 = vmatprep.subr.bf16.mxu0 0
        %821 = vmatpush1.bf16.msra.mxu0 0
        %822 = vmatprep.subr.bf16.mxu0 0
        %823 = vmatpush1.bf16.msra.mxu0 0
        %824 = vmatprep.subr.bf16.mxu0 0
        %825 = vmatpush1.bf16.msra.mxu0 0
        %826 = vmatprep.subr.bf16.mxu0 0
        %827 = vmatpush1.bf16.msra.mxu0 0
        %828 = vmatprep.subr.bf16.mxu0 0
        %829 = vmatpush1.bf16.msra.mxu0 0
        %830 = vmatprep.subr.bf16.mxu0 0
        %831 = vmatpush1.bf16.msra.mxu0 0
        %832 = vmatprep.subr.bf16.mxu0 0
        %833 = vmatpush1.bf16.msra.mxu0 0
        %834 = vmatprep.subr.bf16.mxu0 0
        %835 = vmatpush1.bf16.msra.mxu0 0
        %836 = vmatprep.subr.bf16.mxu0 0
        %837 = vmatpush1.bf16.msra.mxu0 0
        %838 = vmatprep.subr.bf16.mxu0 0
        %839 = vmatpush1.bf16.msra.mxu0 0
        %840 = vmatprep.mubr.bf16.mxu0 0
        %841 = vmatmul.mubr.bf16.gmra.mrb[0].mxu0 %v803
        %v842 = vpop.f32.mrb[0].mxu0
        %v843 = vadd.f32 0.0, %v842
        %v844 = vpop.f32.mrb[0].mxu0
        %v845 = vpop.f32.mrb[0].mxu0
        %v846 = vpop.f32.mrb[0].mxu0
        %847 = vdwg.mxu0
        %v848 = vadd.f32 %v796, %v843
        %s849 = scalar_lea.vmem %s5, 8
        %v850 = vld [vmem:[%s849] sm:$0xf]
        %851 = vrot.lane.b32.xlu0 %v597, 126
        %v852 = vpop.permute.xlu0 %851
        %v854 = vsel %vm450, %v850, 0
        %v857 = vsel %vm454, %v852, 0
        %859 = vmatprep.subr.bf16.mxu0 0
        %860 = vmatpush1.bf16.msra.mxu0 %v857
        %861 = vmatprep.subr.bf16.mxu0 0
        %862 = vmatpush1.bf16.msra.mxu0 0
        %863 = vmatprep.subr.bf16.mxu0 0
        %864 = vmatpush1.bf16.msra.mxu0 0
        %865 = vmatprep.subr.bf16.mxu0 0
        %866 = vmatpush1.bf16.msra.mxu0 0
        %867 = vmatprep.subr.bf16.mxu0 0
        %868 = vmatpush1.bf16.msra.mxu0 0
        %869 = vmatprep.subr.bf16.mxu0 0
        %870 = vmatpush1.bf16.msra.mxu0 0
        %871 = vmatprep.subr.bf16.mxu0 0
        %872 = vmatpush1.bf16.msra.mxu0 0
        %873 = vmatprep.subr.bf16.mxu0 0
        %874 = vmatpush1.bf16.msra.mxu0 0
        %875 = vmatprep.subr.bf16.mxu0 0
        %876 = vmatpush1.bf16.msra.mxu0 0
        %877 = vmatprep.subr.bf16.mxu0 0
        %878 = vmatpush1.bf16.msra.mxu0 0
        %879 = vmatprep.subr.bf16.mxu0 0
        %880 = vmatpush1.bf16.msra.mxu0 0
        %881 = vmatprep.subr.bf16.mxu0 0
        %882 = vmatpush1.bf16.msra.mxu0 0
        %883 = vmatprep.subr.bf16.mxu0 0
        %884 = vmatpush1.bf16.msra.mxu0 0
        %885 = vmatprep.subr.bf16.mxu0 0
        %886 = vmatpush1.bf16.msra.mxu0 0
        %887 = vmatprep.subr.bf16.mxu0 0
        %888 = vmatpush1.bf16.msra.mxu0 0
        %889 = vmatprep.subr.bf16.mxu0 0
        %890 = vmatpush1.bf16.msra.mxu0 0
        %891 = vmatprep.mubr.bf16.mxu0 0
        %892 = vmatmul.mubr.bf16.gmra.mrb[0].mxu0 %v854
        %v893 = vpop.f32.mrb[0].mxu0
        %v894 = vadd.f32 0.0, %v893
        %v895 = vpop.f32.mrb[0].mxu0
        %v896 = vpop.f32.mrb[0].mxu0
        %v897 = vpop.f32.mrb[0].mxu0
        %898 = vdwg.mxu0
        %v899 = vadd.f32 %v848, %v894
        %v900 = vld [vmem:[%s6] sm:$0xff]
        %902 = vset.pattern.permute.xlu0 0
        %903 = vperm.xlu0 %902, %v900
        %v904 = vpop.permute.xlu0 %903
        %v906 = vadd.f32 %v899, %v904
        %v907 = vmax.f32 %v906, 0.0
        %v908 = vld [vmem:[%s9] sm:$0x1]
        %v910 = vlaneseq
        %v911 = vshrl.u32 %v910, 7
        %v912 = vsub.s32 0, %v911
        %v913 = vrot.slane %v908, %v912
        %v915 = vmul.f32 %v907, %v913
        %v916 = vpack.c.bf16 %v915, %v915
        %v917 = vld [vmem:[#allocation8] sm:$0xf]
        %s918 = scalar_lea.vmem [#allocation8], 4
        %v919 = vld [vmem:[%s918] sm:$0xf]
        %921 = vrot.lane.b32.xlu0 %v916, 127
        %v922 = vpop.permute.xlu0 %921
        %v924 = vsel %vm450, %v919, 0
        %v927 = vsel %vm454, %v922, 0
        %929 = vmatprep.subr.bf16.mxu0 0
        %930 = vmatpush1.bf16.msra.mxu0 %v927
        %931 = vmatprep.subr.bf16.mxu0 0
        %932 = vmatpush1.bf16.msra.mxu0 0
        %933 = vmatprep.subr.bf16.mxu0 0
        %934 = vmatpush1.bf16.msra.mxu0 0
        %935 = vmatprep.subr.bf16.mxu0 0
        %936 = vmatpush1.bf16.msra.mxu0 0
        %937 = vmatprep.subr.bf16.mxu0 0
        %938 = vmatpush1.bf16.msra.mxu0 0
        %939 = vmatprep.subr.bf16.mxu0 0
        %940 = vmatpush1.bf16.msra.mxu0 0
        %941 = vmatprep.subr.bf16.mxu0 0
        %942 = vmatpush1.bf16.msra.mxu0 0
        %943 = vmatprep.subr.bf16.mxu0 0
        %944 = vmatpush1.bf16.msra.mxu0 0
        %945 = vmatprep.subr.bf16.mxu0 0
        %946 = vmatpush1.bf16.msra.mxu0 0
        %947 = vmatprep.subr.bf16.mxu0 0
        %948 = vmatpush1.bf16.msra.mxu0 0
        %949 = vmatprep.subr.bf16.mxu0 0
        %950 = vmatpush1.bf16.msra.mxu0 0
        %951 = vmatprep.subr.bf16.mxu0 0
        %952 = vmatpush1.bf16.msra.mxu0 0
        %953 = vmatprep.subr.bf16.mxu0 0
        %954 = vmatpush1.bf16.msra.mxu0 0
        %955 = vmatprep.subr.bf16.mxu0 0
        %956 = vmatpush1.bf16.msra.mxu0 0
        %957 = vmatprep.subr.bf16.mxu0 0
        %958 = vmatpush1.bf16.msra.mxu0 0
        %959 = vmatprep.subr.bf16.mxu0 0
        %960 = vmatpush1.bf16.msra.mxu0 0
        %961 = vmatprep.mubr.bf16.mxu0 0
        %962 = vmatmul.mubr.bf16.gmra.mrb[0].mxu0 %v924
        %v963 = vpop.f32.mrb[0].mxu0
        %v964 = vadd.f32 0.0, %v963
        %v965 = vpop.f32.mrb[0].mxu0
        %v966 = vpop.f32.mrb[0].mxu0
        %v967 = vpop.f32.mrb[0].mxu0
        %968 = vdwg.mxu0
        %v970 = vsel %vm450, %v917, 0
        %v973 = vsel %vm454, %v916, 0
        %975 = vmatprep.subr.bf16.mxu0 0
        %976 = vmatpush1.bf16.msra.mxu0 %v973
        %977 = vmatprep.subr.bf16.mxu0 0
        %978 = vmatpush1.bf16.msra.mxu0 0
        %979 = vmatprep.subr.bf16.mxu0 0
        %980 = vmatpush1.bf16.msra.mxu0 0
        %981 = vmatprep.subr.bf16.mxu0 0
        %982 = vmatpush1.bf16.msra.mxu0 0
        %983 = vmatprep.subr.bf16.mxu0 0
        %984 = vmatpush1.bf16.msra.mxu0 0
        %985 = vmatprep.subr.bf16.mxu0 0
        %986 = vmatpush1.bf16.msra.mxu0 0
        %987 = vmatprep.subr.bf16.mxu0 0
        %988 = vmatpush1.bf16.msra.mxu0 0
        %989 = vmatprep.subr.bf16.mxu0 0
        %990 = vmatpush1.bf16.msra.mxu0 0
        %991 = vmatprep.subr.bf16.mxu0 0
        %992 = vmatpush1.bf16.msra.mxu0 0
        %993 = vmatprep.subr.bf16.mxu0 0
        %994 = vmatpush1.bf16.msra.mxu0 0
        %995 = vmatprep.subr.bf16.mxu0 0
        %996 = vmatpush1.bf16.msra.mxu0 0
        %997 = vmatprep.subr.bf16.mxu0 0
        %998 = vmatpush1.bf16.msra.mxu0 0
        %999 = vmatprep.subr.bf16.mxu0 0
        %1000 = vmatpush1.bf16.msra.mxu0 0
        %1001 = vmatprep.subr.bf16.mxu0 0
        %1002 = vmatpush1.bf16.msra.mxu0 0
        %1003 = vmatprep.subr.bf16.mxu0 0
        %1004 = vmatpush1.bf16.msra.mxu0 0
        %1005 = vmatprep.subr.bf16.mxu0 0
        %1006 = vmatpush1.bf16.msra.mxu0 0
        %1007 = vmatprep.mubr.bf16.mxu0 0
        %1008 = vmatmul.mubr.bf16.gmra.mrb[0].mxu0 %v970
        %v1009 = vpop.f32.mrb[0].mxu0
        %v1010 = vadd.f32 %v964, %v1009
        %v1011 = vpop.f32.mrb[0].mxu0
        %v1012 = vpop.f32.mrb[0].mxu0
        %v1013 = vpop.f32.mrb[0].mxu0
        %1014 = vdwg.mxu0
        %s1015 = scalar_lea.vmem [#allocation8], 8
        %v1016 = vld [vmem:[%s1015] sm:$0xf]
        %1017 = vrot.lane.b32.xlu0 %v916, 126
        %v1018 = vpop.permute.xlu0 %1017
        %v1020 = vsel %vm450, %v1016, 0
        %v1023 = vsel %vm454, %v1018, 0
        %1025 = vmatprep.subr.bf16.mxu0 0
        %1026 = vmatpush1.bf16.msra.mxu0 %v1023
        %1027 = vmatprep.subr.bf16.mxu0 0
        %1028 = vmatpush1.bf16.msra.mxu0 0
        %1029 = vmatprep.subr.bf16.mxu0 0
        %1030 = vmatpush1.bf16.msra.mxu0 0
        %1031 = vmatprep.subr.bf16.mxu0 0
        %1032 = vmatpush1.bf16.msra.mxu0 0
        %1033 = vmatprep.subr.bf16.mxu0 0
        %1034 = vmatpush1.bf16.msra.mxu0 0
        %1035 = vmatprep.subr.bf16.mxu0 0
        %1036 = vmatpush1.bf16.msra.mxu0 0
        %1037 = vmatprep.subr.bf16.mxu0 0
        %1038 = vmatpush1.bf16.msra.mxu0 0
        %1039 = vmatprep.subr.bf16.mxu0 0
        %1040 = vmatpush1.bf16.msra.mxu0 0
        %1041 = vmatprep.subr.bf16.mxu0 0
        %1042 = vmatpush1.bf16.msra.mxu0 0
        %1043 = vmatprep.subr.bf16.mxu0 0
        %1044 = vmatpush1.bf16.msra.mxu0 0
        %1045 = vmatprep.subr.bf16.mxu0 0
        %1046 = vmatpush1.bf16.msra.mxu0 0
        %1047 = vmatprep.subr.bf16.mxu0 0
        %1048 = vmatpush1.bf16.msra.mxu0 0
        %1049 = vmatprep.subr.bf16.mxu0 0
        %1050 = vmatpush1.bf16.msra.mxu0 0
        %1051 = vmatprep.subr.bf16.mxu0 0
        %1052 = vmatpush1.bf16.msra.mxu0 0
        %1053 = vmatprep.subr.bf16.mxu0 0
        %1054 = vmatpush1.bf16.msra.mxu0 0
        %1055 = vmatprep.subr.bf16.mxu0 0
        %1056 = vmatpush1.bf16.msra.mxu0 0
        %1057 = vmatprep.mubr.bf16.mxu0 0
        %1058 = vmatmul.mubr.bf16.gmra.mrb[0].mxu0 %v1020
        %v1059 = vpop.f32.mrb[0].mxu0
        %v1060 = vadd.f32 0.0, %v1059
        %v1061 = vpop.f32.mrb[0].mxu0
        %v1062 = vpop.f32.mrb[0].mxu0
        %v1063 = vpop.f32.mrb[0].mxu0
        %1064 = vdwg.mxu0
        %v1065 = vadd.f32 %v1010, %v1060
        %v1066 = vld [vmem:[%s8] sm:$0xff]
        %1068 = vset.pattern.permute.xlu0 0
        %1069 = vperm.xlu0 %1068, %v1066
        %v1070 = vpop.permute.xlu0 %1069
        %v1072 = vadd.f32 %v1065, %v1070
        %v1073 = vmax.f32 %v1072, 0.0
        %vm1074 = vcmask 158720
        %1075 = vst.msk [vmem:[%s438] sm:$0xf] %vm1074, %v1073
        %s1076 = sand.u32 %s259, 1
        %s1077 = scalar_lea.sflag [#allocation4], %s1076
        %s1078 = sand.u32 %s259, 1
        %s1079 = smul.addr %s1078, 4
        %s1080 = scalar_lea.vmem [#allocation10], %s1079
        // Predicated region
        $region77: #{tpu_custom_call.1} parent=59 // pred_check
          %p1081 = pneg %p269
        $region78: #{tpu_custom_call.1} parent=59 // pred_check_branch
          %1083 = sbr.rel (%p1081) target = $region80
        $region79: #{tpu_custom_call.1} parent=59 // pred_region
          %s1085 = ssub.s32 64, 64
          %1086 = vsyncadd %s1077, %s1085
          %s1087 = smul.addr %s31, 64
          %s1088 = scalar_lea.hbm %s10, %s1087
          %s1090 = sshll.u32 %s1080, 4
          %s1091 = int_to_ptr.vmem [resolvable:$true] %s1090
          %1093 = dma.vmem_to_hbm [thread:$0]  %s1091, 64, %s1088, %s1077
        $region80: #{tpu_custom_call.1} parent=59 // pred_fallthru
          _
      $region60: #{tpu_custom_call.1} parent=5 // pred_fallthru
        _
      %p1094 = scmp.le.s32.totalorder 2, %s26
      // Predicated region
      $region81: #{tpu_custom_call.1} parent=5 // pred_check
        %p1095 = pneg %p1094
      $region82: #{tpu_custom_call.1} parent=5 // pred_check_branch
        %1097 = sbr.rel (%p1095) target = $region84
      $region83: #{tpu_custom_call.1} parent=5 // pred_region
        %s1098 = ssub.s32 %s26, 2
        // Predicated region
        $region85: #{tpu_custom_call.1} parent=83 // pred_check
          %p1099 = pneg %p275
        $region86: #{tpu_custom_call.1} parent=83 // pred_check_branch
          %1101 = sbr.rel (%p1099) target = $region88
        $region87: #{tpu_custom_call.1} parent=83 // pred_region
          %s1102 = sand.u32 %s260, 1
          %s1103 = scalar_lea.sflag [#allocation4], %s1102
          %s1104 = sand.u32 %s260, 1
          %s1105 = smul.addr %s1104, 4
          %s1106 = scalar_lea.vmem [#allocation10], %s1105
          %1107 = dma.done %s1103, 64
        $region88: #{tpu_custom_call.1} parent=83 // pred_fallthru
          _
      $region84: #{tpu_custom_call.1} parent=5 // pred_fallthru
        _
    $region6: #{tpu_custom_call.1} parent=1 // loop_footer
      %s30 = sadd.s32 1, %s26
    $region7: #{tpu_custom_call.1} parent=1 // loop_footer_branch
      %25 = sbr.rel target = $region3
    $region8: #{tpu_custom_call.1} parent=1 // loop_exit
      _
    %1108 = vsyncpa [#allocation3], 1
    %s1109 = scalar_lea.sflag [#allocation3], 1
    %1110 = vsyncpa %s1109, 1
    %1111 = vsyncpa [#allocation6], 1
    %s1112 = scalar_lea.sflag [#allocation6], 1
    %1113 = vsyncpa %s1112, 1
    %1114 = vsyncpa [#allocation9], 1
    %1115 = vsyncpa [#allocation4], 1
    %s1116 = scalar_lea.sflag [#allocation4], 1
    %1117 = vsyncpa %s1116, 1

</llo_original>
